<compile_context>
chip_gen: v7x
topology: tpu7x:2x2x1
jax: 0.10.0
libtpu: 0.0.40
codegen_flags: <defaults>
</compile_context>

<pallas_src>
import functools
import numpy as np
import jax
import jax.numpy as jnp
from jax.experimental import pallas as pl
from jax.experimental.pallas import tpu as pltpu

_EPS = 1e-5


def _resnet_block_kernel(pre, W, N, x_ref, wpack_ref, ppack_ref, o_ref):
    """Fused ResNet_Block forward, batch+channel rows fused onto sublanes.

    x_ref    : (N*Cin,  H*W)        activations, H*W on the 128-lane axis
    wpack_ref: (3, N*Cout, 3*N*Cm)  per-conv weights: taps [w-1 | w | w+1] on
                                    the contraction axis, each tap
                                    block-diagonal over the batch
    ppack_ref: (9, N*Cout, 1)       rows: b1,g1,be1,b2,g2,be2,br,gr,ber
    o_ref    : (N*Cout, H*W)
    """
    f32 = jnp.float32
    HW = x_ref.shape[1]

    x = x_ref[...].astype(f32)
    wp = wpack_ref[...].astype(f32)
    pp = ppack_ref[...].astype(f32)

    # (1,3) conv halo masks along the flattened H*W lane axis: w == 0 has no
    # left neighbour, w == W-1 has no right neighbour.  Hoisted, shared by all
    # three convs (the circular roll wrap only ever lands on masked lanes).
    col = jax.lax.broadcasted_iota(jnp.int32, (1, HW), 1) % W
    not_first = (col != 0).astype(f32)
    not_last = (col != (W - 1)).astype(f32)

    def _dot(a, b):
        # MXU matmul, full f32 precision to match the reference conv.
        return jnp.dot(a, b, preferred_element_type=f32,
                       precision=jax.lax.Precision.HIGHEST)

    def conv1x3(y, w_bd, bias):
        # y: (R, HW) with R = N*C.  Taps via XLU lane rolls + boundary masks;
        # the whole batched channel contraction is a single 2-D MXU matmul.
        R = y.shape[0]
        t_m1 = pltpu.roll(y, 1, 1) * not_first        # value at w-1
        t_p1 = pltpu.roll(y, HW - 1, 1) * not_last    # value at w+1
        ycat = jnp.concatenate([t_m1, y, t_p1], axis=0)          # (3R, HW)
        return _dot(w_bd[:, :3 * R], ycat) + bias                # (N*Cout, HW)

    def _batch_mean_rows(s, C):
        # Per-channel mean over the batch of a per-row (N*C, 1) column,
        # broadcast back to all N*C rows.  N is tiny & static.
        m = sum([s[n * C:(n + 1) * C] for n in range(N)]) / N    # (C, 1)
        return jnp.concatenate([m] * N, axis=0)                  # (N*C, 1)

    def inst_then_batch_norm(y, g, b):
        # nn.InstanceNorm2d (no affine) -> nn.BatchNorm2d (train-mode), fused.
        C = y.shape[0] // N
        m = jnp.mean(y, axis=1, keepdims=True)                   # per-row mean
        v = jnp.mean(y * y, axis=1, keepdims=True) - m * m       # biased var
        inv = jax.lax.rsqrt(v + _EPS)
        z = (y - m) * inv                                        # instance-norm
        bn_var = _batch_mean_rows(v * inv * inv, C)              # mean_n v/(v+eps)
        return z * jax.lax.rsqrt(bn_var + _EPS) * g + b

    def batch_norm(y, g, b):                                     # right branch BN
        C = y.shape[0] // N
        s1 = _batch_mean_rows(jnp.mean(y, axis=1, keepdims=True), C)
        s2 = _batch_mean_rows(jnp.mean(y * y, axis=1, keepdims=True), C)
        return (y - s1) * jax.lax.rsqrt(s2 - s1 * s1 + _EPS) * g + b

    # ---- left branch: conv -> IN -> BN -> ReLU -> conv -> IN -> BN ----
    yl = conv1x3(x, wp[0], pp[0])
    yl = jnp.maximum(inst_then_batch_norm(yl, pp[1], pp[2]), 0.0)
    yl = inst_then_batch_norm(conv1x3(yl, wp[1], pp[3]), pp[4], pp[5])

    # ---- right branch / residual ----
    if pre:
        r = batch_norm(conv1x3(x, wp[2], pp[6]), pp[7], pp[8])
    else:
        r = x                               # identity (requires Cin == Cout)

    o_ref[...] = jnp.maximum(yl + r, 0.0).astype(o_ref.dtype)


def _full_spec(shape):
    n = len(shape)
    return pl.BlockSpec(shape, lambda i, n=n: (0,) * n)


def _pack_weights(params, N, Cin, Cout):
    """PyTorch (Cout, C, 1, 3) conv weights -> one (3, N*Cout, 3*N*Cm) operand.

    For each conv, tap k becomes a (Cout, C) matrix replicated block-diagonally
    over the batch (kron with I_N); taps are concatenated on the contraction
    axis in [w-1, w, w+1] order and zero-padded to a common width so the three
    convs stack into a single kernel input.
    """
    Cm = max(Cin, Cout)
    eye_n = jnp.eye(N, dtype=jnp.float32)

    def one(w):
        w = w.astype(jnp.float32)
        taps = [jnp.kron(eye_n, w[:, :, 0, k]) for k in range(3)]
        m = jnp.concatenate(taps, axis=1)                 # (N*Cout, 3*N*C)
        return jnp.pad(m, ((0, 0), (0, 3 * N * Cm - m.shape[1])))

    return jnp.stack([one(params["w1"]), one(params["w2"]), one(params["wr"])],
                     axis=0)


def resnet_block_forward(x_nchw, params, pre=False):
    # TODO(synk): stride > 1 (downsampling along W) not implemented; module default stride=1.
    # TODO(synk): no grid tiling / megacore split: train-mode BatchNorm couples the whole
    #             batch, so at these tiny sizes the block runs as one fused program.
    N, Cin, H, W = x_nchw.shape
    Cout = params["w1"].shape[0]
    if not pre:
        assert Cin == Cout, "identity residual requires inchannel == outchannel"

    # (N, C, H, W) -> (N*C, H*W): pure row-major HBM reinterpretation.
    x2 = x_nchw.reshape(N * Cin, H * W).astype(jnp.float32)

    wpack = _pack_weights(params, N, Cin, Cout)
    ppack = jnp.stack(
        [jnp.tile(params[k].astype(jnp.float32).reshape(Cout, 1), (N, 1))
         for k in ("b1", "g1", "be1", "b2", "g2", "be2", "br", "gr", "ber")],
        axis=0)                                           # (9, N*Cout, 1)

    out = pl.pallas_call(
        functools.partial(_resnet_block_kernel, pre, W, N),
        out_shape=jax.ShapeDtypeStruct((N * Cout, H * W), jnp.float32),
        grid=(1,),
        in_specs=[_full_spec(x2.shape), _full_spec(wpack.shape),
                  _full_spec(ppack.shape)],
        out_specs=_full_spec((N * Cout, H * W)),
        compiler_params=pltpu.CompilerParams(
            dimension_semantics=("arbitrary",)),
    )(x2, wpack, ppack)

    return out.reshape(N, Cout, H, W)                     # free reinterpretation


# ---------------- pure-JAX reference (NCHW, mirrors the PyTorch module) ----------------
def resnet_block_reference(x, p, pre=False):
    def conv(x, w, b):
        y = jax.lax.conv_general_dilated(
            x, w, window_strides=(1, 1), padding=((0, 0), (1, 1)),
            dimension_numbers=("NCHW", "OIHW", "NCHW"),
            precision=jax.lax.Precision.HIGHEST)
        return y + b.reshape(1, -1, 1, 1)

    def inorm(y):
        m = y.mean(axis=(2, 3), keepdims=True)
        v = jnp.square(y - m).mean(axis=(2, 3), keepdims=True)
        return (y - m) * jax.lax.rsqrt(v + _EPS)

    def bnorm(y, g, b):
        m = y.mean(axis=(0, 2, 3), keepdims=True)
        v = jnp.square(y - m).mean(axis=(0, 2, 3), keepdims=True)
        return ((y - m) * jax.lax.rsqrt(v + _EPS)
                * g.reshape(1, -1, 1, 1) + b.reshape(1, -1, 1, 1))

    left = jnp.maximum(bnorm(inorm(conv(x, p["w1"], p["b1"])), p["g1"], p["be1"]), 0.0)
    left = bnorm(inorm(conv(left, p["w2"], p["b2"])), p["g2"], p["be2"])
    right = bnorm(conv(x, p["wr"], p["br"]), p["gr"], p["ber"]) if pre else x
    return jnp.maximum(left + right, 0.0)


if __name__ == "__main__":
    N, C, H, W = 2, 4, 16, 16          # inchannel == outchannel == 4, stride=1
    key = jax.random.PRNGKey(0)
    keys = jax.random.split(key, 13)

    def nrm(k, shape, scale=0.3):
        return scale * jax.random.normal(k, shape, jnp.float32)

    params = dict(
        w1=nrm(keys[0], (C, C, 1, 3)), b1=nrm(keys[1], (C,), 0.1),
        g1=1.0 + nrm(keys[2], (C,), 0.1), be1=nrm(keys[3], (C,), 0.1),
        w2=nrm(keys[4], (C, C, 1, 3)), b2=nrm(keys[5], (C,), 0.1),
        g2=1.0 + nrm(keys[6], (C,), 0.1), be2=nrm(keys[7], (C,), 0.1),
        wr=nrm(keys[8], (C, C, 1, 3)), br=nrm(keys[9], (C,), 0.1),
        gr=1.0 + nrm(keys[10], (C,), 0.1), ber=nrm(keys[11], (C,), 0.1),
    )
    x = jax.random.normal(keys[12], (N, C, H, W), jnp.float32)

    ok = True
    for pre in (False, True):
        out = jax.block_until_ready(resnet_block_forward(x, params, pre=pre))
        ref = jax.block_until_ready(resnet_block_reference(x, params, pre=pre))
        if not np.allclose(np.asarray(out), np.asarray(ref), atol=1e-3, rtol=1e-3):
            ok = False
            print("mismatch (pre=%s), max abs err = %g"
                  % (pre, float(np.max(np.abs(np.asarray(out) - np.asarray(ref))))))
    if not ok:
        raise SystemExit("FAILED")
    print("KERNEL_OK")
</pallas_src>

<mosaic_0001>
module attributes {stable_mosaic.version = 11 : i64} {
  func.func @_resnet_block_kernel(%arg0: i32, %arg1: memref<8x256xf32, #tpu.memory_space<vmem>>, %arg2: memref<3x8x24xf32, #tpu.memory_space<vmem>>, %arg3: memref<9x8x1xf32, #tpu.memory_space<vmem>>, %arg4: memref<8x256xf32, #tpu.memory_space<vmem>>) attributes {dimension_semantics = [#tpu.dimension_semantics<arbitrary>], iteration_bounds = array<i64: 1>, scalar_prefetch = 0 : i64, scratch_operands = 0 : i64, tpu.core_type = #tpu.core_type<tc>, window_params = [{pipeline_mode = #tpu.pipeline_mode<synchronous>, transform_indices = @transform_0, window_bounds = array<i64: 8, 256>}, {pipeline_mode = #tpu.pipeline_mode<synchronous>, transform_indices = @transform_1, window_bounds = array<i64: 3, 8, 24>}, {pipeline_mode = #tpu.pipeline_mode<synchronous>, transform_indices = @transform_2, window_bounds = array<i64: 9, 8, 1>}, {pipeline_mode = #tpu.pipeline_mode<synchronous>, transform_indices = @transform_3, window_bounds = array<i64: 8, 256>}]} {
    %c0 = arith.constant 0 : index
    %c0_0 = arith.constant 0 : index
    %0 = vector.load %arg1[%c0, %c0_0] : memref<8x256xf32, #tpu.memory_space<vmem>>, vector<8x256xf32>
    %c0_1 = arith.constant 0 : index
    %c0_2 = arith.constant 0 : index
    %c0_3 = arith.constant 0 : index
    %1 = vector.load %arg2[%c0_1, %c0_2, %c0_3] : memref<3x8x24xf32, #tpu.memory_space<vmem>>, vector<3x8x24xf32>
    %c0_4 = arith.constant 0 : index
    %c0_5 = arith.constant 0 : index
    %c0_6 = arith.constant 0 : index
    %2 = vector.load %arg3[%c0_4, %c0_5, %c0_6] : memref<9x8x1xf32, #tpu.memory_space<vmem>>, vector<9x8x1xf32>
    %3 = tpu.iota {dimensions = array<i32: 1>} : vector<1x256xi32>
    %c16_i32 = arith.constant 16 : i32
    %c0_i32 = arith.constant 0 : i32
    %4 = arith.cmpi eq, %c16_i32, %c0_i32 : i32
    %c1_i32 = arith.constant 1 : i32
    %5 = arith.select %4, %c1_i32, %c16_i32 : i32
    %6 = vector.broadcast %5 : i32 to vector<1x256xi32>
    %7 = arith.remsi %3, %6 : vector<1x256xi32>
    %c0_i32_7 = arith.constant 0 : i32
    %8 = vector.broadcast %c0_i32_7 : i32 to vector<1x256xi32>
    %9 = arith.cmpi ne, %7, %8 : vector<1x256xi32>
    %c0_i32_8 = arith.constant 0 : i32
    %10 = vector.broadcast %c0_i32_8 : i32 to vector<1x256xi32>
    %11 = arith.cmpi slt, %7, %10 : vector<1x256xi32>
    %c0_i32_9 = arith.constant 0 : i32
    %12 = arith.cmpi slt, %5, %c0_i32_9 : i32
    %13 = vector.broadcast %12 : i1 to vector<1x256xi1>
    %14 = vector.broadcast %13 : vector<1x256xi1> to vector<1x256xi1>
    %15 = arith.xori %11, %14 : vector<1x256xi1>
    %16 = arith.andi %15, %9 : vector<1x256xi1>
    %17 = vector.broadcast %5 : i32 to vector<1x256xi32>
    %18 = arith.addi %7, %17 : vector<1x256xi32>
    %19 = arith.select %16, %18, %7 : vector<1x256xi1>, vector<1x256xi32>
    %c0_i32_10 = arith.constant 0 : i32
    %20 = vector.broadcast %c0_i32_10 : i32 to vector<1x256xi32>
    %21 = arith.cmpi ne, %19, %20 : vector<1x256xi32>
    %22 = arith.extui %21 : vector<1x256xi1> to vector<1x256xi32>
    %23 = arith.sitofp %22 : vector<1x256xi32> to vector<1x256xf32>
    %c15_i32 = arith.constant 15 : i32
    %24 = vector.broadcast %c15_i32 : i32 to vector<1x256xi32>
    %25 = arith.cmpi ne, %19, %24 : vector<1x256xi32>
    %26 = arith.extui %25 : vector<1x256xi1> to vector<1x256xi32>
    %27 = arith.sitofp %26 : vector<1x256xi32> to vector<1x256xf32>
    %28 = vector.extract_strided_slice %1 {offsets = [0, 0, 0], sizes = [1, 8, 24], strides = [1, 1, 1]} : vector<3x8x24xf32> to vector<1x8x24xf32>
    %29 = vector.shape_cast %28 : vector<1x8x24xf32> to vector<8x24xf32>
    %30 = vector.extract_strided_slice %2 {offsets = [0, 0, 0], sizes = [1, 8, 1], strides = [1, 1, 1]} : vector<9x8x1xf32> to vector<1x8x1xf32>
    %31 = vector.shape_cast %30 : vector<1x8x1xf32> to vector<8x1xf32>
    %c1_i32_11 = arith.constant 1 : i32
    %32 = tpu.dynamic_rotate %0 by %c1_i32_11 dim 1 : vector<8x256xf32>, i32 -> vector<8x256xf32>
    %33 = vector.broadcast %23 : vector<1x256xf32> to vector<8x256xf32>
    %34 = arith.mulf %32, %33 : vector<8x256xf32>
    %c255_i32 = arith.constant 255 : i32
    %35 = tpu.dynamic_rotate %0 by %c255_i32 dim 1 : vector<8x256xf32>, i32 -> vector<8x256xf32>
    %36 = vector.broadcast %27 : vector<1x256xf32> to vector<8x256xf32>
    %37 = arith.mulf %35, %36 : vector<8x256xf32>
    %38 = tpu.concatenate %34, %0, %37 in 0 : vector<8x256xf32>, vector<8x256xf32>, vector<8x256xf32> -> vector<24x256xf32>
    %cst = arith.constant dense<0.000000e+00> : vector<8x256xf32>
    %39 = tpu.matmul %29, %38, %cst {dimension_numbers = #tpu.dot_dimension_numbers<[1], [0], [0], [1], [0, 0, 1, 1], [], []>, precision = #tpu.contract_precision<fp32>} : vector<8x24xf32>, vector<24x256xf32>, vector<8x256xf32> -> vector<8x256xf32>
    %40 = vector.broadcast %31 : vector<8x1xf32> to vector<8x256xf32>
    %41 = arith.addf %39, %40 : vector<8x256xf32>
    %42 = vector.extract_strided_slice %2 {offsets = [1, 0, 0], sizes = [1, 8, 1], strides = [1, 1, 1]} : vector<9x8x1xf32> to vector<1x8x1xf32>
    %43 = vector.shape_cast %42 : vector<1x8x1xf32> to vector<8x1xf32>
    %44 = vector.extract_strided_slice %2 {offsets = [2, 0, 0], sizes = [1, 8, 1], strides = [1, 1, 1]} : vector<9x8x1xf32> to vector<1x8x1xf32>
    %45 = vector.shape_cast %44 : vector<1x8x1xf32> to vector<8x1xf32>
    %cst_12 = arith.constant dense<0.000000e+00> : vector<8xf32>
    %46 = vector.multi_reduction <add>, %41, %cst_12 [1] : vector<8x256xf32> to vector<8xf32>
    %47 = vector.shape_cast %46 : vector<8xf32> to vector<8x1xf32>
    %cst_13 = arith.constant 2.560000e+02 : f32
    %48 = vector.broadcast %cst_13 : f32 to vector<8x1xf32>
    %49 = arith.divf %47, %48 : vector<8x1xf32>
    %50 = arith.mulf %41, %41 : vector<8x256xf32>
    %cst_14 = arith.constant dense<0.000000e+00> : vector<8xf32>
    %51 = vector.multi_reduction <add>, %50, %cst_14 [1] : vector<8x256xf32> to vector<8xf32>
    %52 = vector.shape_cast %51 : vector<8xf32> to vector<8x1xf32>
    %cst_15 = arith.constant 2.560000e+02 : f32
    %53 = vector.broadcast %cst_15 : f32 to vector<8x1xf32>
    %54 = arith.divf %52, %53 : vector<8x1xf32>
    %55 = arith.mulf %49, %49 : vector<8x1xf32>
    %56 = arith.subf %54, %55 : vector<8x1xf32>
    %cst_16 = arith.constant 9.99999974E-6 : f32
    %57 = vector.broadcast %cst_16 : f32 to vector<8x1xf32>
    %58 = arith.addf %56, %57 : vector<8x1xf32>
    %59 = math.rsqrt %58 : vector<8x1xf32>
    %60 = vector.broadcast %49 : vector<8x1xf32> to vector<8x256xf32>
    %61 = arith.subf %41, %60 : vector<8x256xf32>
    %62 = vector.broadcast %59 : vector<8x1xf32> to vector<8x256xf32>
    %63 = arith.mulf %61, %62 : vector<8x256xf32>
    %64 = arith.mulf %56, %59 : vector<8x1xf32>
    %65 = arith.mulf %64, %59 : vector<8x1xf32>
    %66 = vector.extract_strided_slice %65 {offsets = [0, 0], sizes = [4, 1], strides = [1, 1]} : vector<8x1xf32> to vector<4x1xf32>
    %67 = vector.extract_strided_slice %65 {offsets = [4, 0], sizes = [4, 1], strides = [1, 1]} : vector<8x1xf32> to vector<4x1xf32>
    %cst_17 = arith.constant 0.000000e+00 : f32
    %68 = vector.broadcast %cst_17 : f32 to vector<4x1xf32>
    %69 = arith.addf %68, %66 : vector<4x1xf32>
    %70 = arith.addf %69, %67 : vector<4x1xf32>
    %cst_18 = arith.constant 2.000000e+00 : f32
    %71 = vector.broadcast %cst_18 : f32 to vector<4x1xf32>
    %72 = arith.divf %70, %71 : vector<4x1xf32>
    %73 = tpu.concatenate %72, %72 in 0 : vector<4x1xf32>, vector<4x1xf32> -> vector<8x1xf32>
    %cst_19 = arith.constant 9.99999974E-6 : f32
    %74 = vector.broadcast %cst_19 : f32 to vector<8x1xf32>
    %75 = arith.addf %73, %74 : vector<8x1xf32>
    %76 = math.rsqrt %75 : vector<8x1xf32>
    %77 = vector.broadcast %76 : vector<8x1xf32> to vector<8x256xf32>
    %78 = arith.mulf %63, %77 : vector<8x256xf32>
    %79 = vector.broadcast %43 : vector<8x1xf32> to vector<8x256xf32>
    %80 = arith.mulf %78, %79 : vector<8x256xf32>
    %81 = vector.broadcast %45 : vector<8x1xf32> to vector<8x256xf32>
    %82 = arith.addf %80, %81 : vector<8x256xf32>
    %cst_20 = arith.constant 0.000000e+00 : f32
    %83 = vector.broadcast %cst_20 : f32 to vector<8x256xf32>
    %84 = arith.maximumf %82, %83 : vector<8x256xf32>
    %85 = vector.extract_strided_slice %1 {offsets = [1, 0, 0], sizes = [1, 8, 24], strides = [1, 1, 1]} : vector<3x8x24xf32> to vector<1x8x24xf32>
    %86 = vector.shape_cast %85 : vector<1x8x24xf32> to vector<8x24xf32>
    %87 = vector.extract_strided_slice %2 {offsets = [3, 0, 0], sizes = [1, 8, 1], strides = [1, 1, 1]} : vector<9x8x1xf32> to vector<1x8x1xf32>
    %88 = vector.shape_cast %87 : vector<1x8x1xf32> to vector<8x1xf32>
    %c1_i32_21 = arith.constant 1 : i32
    %89 = tpu.dynamic_rotate %84 by %c1_i32_21 dim 1 : vector<8x256xf32>, i32 -> vector<8x256xf32>
    %90 = vector.broadcast %23 : vector<1x256xf32> to vector<8x256xf32>
    %91 = arith.mulf %89, %90 : vector<8x256xf32>
    %c255_i32_22 = arith.constant 255 : i32
    %92 = tpu.dynamic_rotate %84 by %c255_i32_22 dim 1 : vector<8x256xf32>, i32 -> vector<8x256xf32>
    %93 = vector.broadcast %27 : vector<1x256xf32> to vector<8x256xf32>
    %94 = arith.mulf %92, %93 : vector<8x256xf32>
    %95 = tpu.concatenate %91, %84, %94 in 0 : vector<8x256xf32>, vector<8x256xf32>, vector<8x256xf32> -> vector<24x256xf32>
    %cst_23 = arith.constant dense<0.000000e+00> : vector<8x256xf32>
    %96 = tpu.matmul %86, %95, %cst_23 {dimension_numbers = #tpu.dot_dimension_numbers<[1], [0], [0], [1], [0, 0, 1, 1], [], []>, precision = #tpu.contract_precision<fp32>} : vector<8x24xf32>, vector<24x256xf32>, vector<8x256xf32> -> vector<8x256xf32>
    %97 = vector.broadcast %88 : vector<8x1xf32> to vector<8x256xf32>
    %98 = arith.addf %96, %97 : vector<8x256xf32>
    %99 = vector.extract_strided_slice %2 {offsets = [4, 0, 0], sizes = [1, 8, 1], strides = [1, 1, 1]} : vector<9x8x1xf32> to vector<1x8x1xf32>
    %100 = vector.shape_cast %99 : vector<1x8x1xf32> to vector<8x1xf32>
    %101 = vector.extract_strided_slice %2 {offsets = [5, 0, 0], sizes = [1, 8, 1], strides = [1, 1, 1]} : vector<9x8x1xf32> to vector<1x8x1xf32>
    %102 = vector.shape_cast %101 : vector<1x8x1xf32> to vector<8x1xf32>
    %cst_24 = arith.constant dense<0.000000e+00> : vector<8xf32>
    %103 = vector.multi_reduction <add>, %98, %cst_24 [1] : vector<8x256xf32> to vector<8xf32>
    %104 = vector.shape_cast %103 : vector<8xf32> to vector<8x1xf32>
    %cst_25 = arith.constant 2.560000e+02 : f32
    %105 = vector.broadcast %cst_25 : f32 to vector<8x1xf32>
    %106 = arith.divf %104, %105 : vector<8x1xf32>
    %107 = arith.mulf %98, %98 : vector<8x256xf32>
    %cst_26 = arith.constant dense<0.000000e+00> : vector<8xf32>
    %108 = vector.multi_reduction <add>, %107, %cst_26 [1] : vector<8x256xf32> to vector<8xf32>
    %109 = vector.shape_cast %108 : vector<8xf32> to vector<8x1xf32>
    %cst_27 = arith.constant 2.560000e+02 : f32
    %110 = vector.broadcast %cst_27 : f32 to vector<8x1xf32>
    %111 = arith.divf %109, %110 : vector<8x1xf32>
    %112 = arith.mulf %106, %106 : vector<8x1xf32>
    %113 = arith.subf %111, %112 : vector<8x1xf32>
    %cst_28 = arith.constant 9.99999974E-6 : f32
    %114 = vector.broadcast %cst_28 : f32 to vector<8x1xf32>
    %115 = arith.addf %113, %114 : vector<8x1xf32>
    %116 = math.rsqrt %115 : vector<8x1xf32>
    %117 = vector.broadcast %106 : vector<8x1xf32> to vector<8x256xf32>
    %118 = arith.subf %98, %117 : vector<8x256xf32>
    %119 = vector.broadcast %116 : vector<8x1xf32> to vector<8x256xf32>
    %120 = arith.mulf %118, %119 : vector<8x256xf32>
    %121 = arith.mulf %113, %116 : vector<8x1xf32>
    %122 = arith.mulf %121, %116 : vector<8x1xf32>
    %123 = vector.extract_strided_slice %122 {offsets = [0, 0], sizes = [4, 1], strides = [1, 1]} : vector<8x1xf32> to vector<4x1xf32>
    %124 = vector.extract_strided_slice %122 {offsets = [4, 0], sizes = [4, 1], strides = [1, 1]} : vector<8x1xf32> to vector<4x1xf32>
    %cst_29 = arith.constant 0.000000e+00 : f32
    %125 = vector.broadcast %cst_29 : f32 to vector<4x1xf32>
    %126 = arith.addf %125, %123 : vector<4x1xf32>
    %127 = arith.addf %126, %124 : vector<4x1xf32>
    %cst_30 = arith.constant 2.000000e+00 : f32
    %128 = vector.broadcast %cst_30 : f32 to vector<4x1xf32>
    %129 = arith.divf %127, %128 : vector<4x1xf32>
    %130 = tpu.concatenate %129, %129 in 0 : vector<4x1xf32>, vector<4x1xf32> -> vector<8x1xf32>
    %cst_31 = arith.constant 9.99999974E-6 : f32
    %131 = vector.broadcast %cst_31 : f32 to vector<8x1xf32>
    %132 = arith.addf %130, %131 : vector<8x1xf32>
    %133 = math.rsqrt %132 : vector<8x1xf32>
    %134 = vector.broadcast %133 : vector<8x1xf32> to vector<8x256xf32>
    %135 = arith.mulf %120, %134 : vector<8x256xf32>
    %136 = vector.broadcast %100 : vector<8x1xf32> to vector<8x256xf32>
    %137 = arith.mulf %135, %136 : vector<8x256xf32>
    %138 = vector.broadcast %102 : vector<8x1xf32> to vector<8x256xf32>
    %139 = arith.addf %137, %138 : vector<8x256xf32>
    %140 = arith.addf %139, %0 : vector<8x256xf32>
    %cst_32 = arith.constant 0.000000e+00 : f32
    %141 = vector.broadcast %cst_32 : f32 to vector<8x256xf32>
    %142 = arith.maximumf %140, %141 : vector<8x256xf32>
    %c0_33 = arith.constant 0 : index
    %c0_34 = arith.constant 0 : index
    %143 = vector.load %arg4[%c0_33, %c0_34] : memref<8x256xf32, #tpu.memory_space<vmem>>, vector<8x256xf32>
    tpu.vector_store %arg4[%c0_33, %c0_34], %142 {strides = array<i32>} : memref<8x256xf32, #tpu.memory_space<vmem>>, vector<8x256xf32>,
    return
  }
  func.func @transform_0(%arg0: i32) -> (i32, i32) {
    %c0_i32 = arith.constant 0 : i32
    %c0_i32_0 = arith.constant 0 : i32
    %c0_i32_1 = arith.constant 0 : i32
    return %c0_i32, %c0_i32_0 : i32, i32
  }
  func.func @transform_1(%arg0: i32) -> (i32, i32, i32) {
    %c0_i32 = arith.constant 0 : i32
    %c0_i32_0 = arith.constant 0 : i32
    %c0_i32_1 = arith.constant 0 : i32
    %c0_i32_2 = arith.constant 0 : i32
    return %c0_i32, %c0_i32_0, %c0_i32_1 : i32, i32, i32
  }
  func.func @transform_2(%arg0: i32) -> (i32, i32, i32) {
    %c0_i32 = arith.constant 0 : i32
    %c0_i32_0 = arith.constant 0 : i32
    %c0_i32_1 = arith.constant 0 : i32
    %c0_i32_2 = arith.constant 0 : i32
    return %c0_i32, %c0_i32_0, %c0_i32_1 : i32, i32, i32
  }
  func.func @transform_3(%arg0: i32) -> (i32, i32) {
    %c0_i32 = arith.constant 0 : i32
    %c0_i32_0 = arith.constant 0 : i32
    %c0_i32_1 = arith.constant 0 : i32
    return %c0_i32, %c0_i32_0 : i32, i32
  }
}

</mosaic_0001>

<llo_original>
// kernel: tpu_custom_call.1
$region0: #{tpu_custom_call.1}
  #allocation0 [shape = 'u32[]', space=smem, size = 0x4, offset = 0x4, fixed_abs, tag = 'smem constant byte address 0x4 - core index']
  #allocation1 [shape = 'u32[144,128]{1,0:T(1,128)}', space=vmem, size = 0x12000, scoped, tag = 'internal scratch']
  %s0 = inlined_call_operand.vmem [shape: f32[8,256], index: 0, kind: input, shape index: {}]
  %s1 = inlined_call_operand.vmem [shape: f32[3,8,24], index: 1, kind: input, shape index: {}]
  %s2 = inlined_call_operand.vmem [shape: f32[9,8,1], index: 2, kind: input, shape index: {}]
  %s3 = inlined_call_operand.hbm [shape: f32[8,256], index: 3, kind: output, shape index: {}]
  %s4 = sld [smem:[#allocation0]]
  $region22: #{tpu_custom_call.1} parent=0
    _
  %s6 = ssub.s32 1, %s4
  %s7 = scalar_select 0, %s6, %s4
  $region1: #{tpu_custom_call.1} parent=0
    #allocation2 [shape = 'u8[8192]{0}', space=vmem, size = 0x2000, scoped, tag = 'output window, operand 0, single buffered']
    #allocation3 [shape = 's32[1]{0}', space=sflag, size = 0x4, scoped, tag = 'scoped memory for tpu_custom_call.1']
    %8 = vsyncpa [#allocation3], 0
    // Predicated region
    $region2: #{tpu_custom_call.1} parent=1 // pred_check
      _
    $region3: #{tpu_custom_call.1} parent=1 // pred_check_branch
      %10 = sbr.rel (0) target = $region5
    $region4: #{tpu_custom_call.1} parent=1 // pred_region
      _
    $region5: #{tpu_custom_call.1} parent=1 // pred_fallthru
      _
    // Predicated region
    $region6: #{tpu_custom_call.1} parent=1 // pred_check
      _
    $region7: #{tpu_custom_call.1} parent=1 // pred_check_branch
      %12 = sbr.rel (0) target = $region9
    $region8: #{tpu_custom_call.1} parent=1 // pred_region
      _
    $region9: #{tpu_custom_call.1} parent=1 // pred_fallthru
      _
    // Predicated region
    $region10: #{tpu_custom_call.1} parent=1 // pred_check
      _
    $region11: #{tpu_custom_call.1} parent=1 // pred_check_branch
      %14 = sbr.rel (0) target = $region13
    $region12: #{tpu_custom_call.1} parent=1 // pred_region
      _
    $region13: #{tpu_custom_call.1} parent=1 // pred_fallthru
      _
    %v15 = vld [vmem:[%s0] sm:$0xff]
    %v16 = vld [vmem:[%s0 + $0x8] sm:$0xff]
    %v17 = vld [vmem:[%s1] sm:$0xff]
    %v18 = vld [vmem:[%s1 + $0x8] sm:$0xff]
    %v19 = vld [vmem:[%s2] sm:$0xff]
    %v20 = vld [vmem:[%s2 + $0x8] sm:$0xff]
    %v21 = vld [vmem:[%s2 + $0x10] sm:$0xff]
    %v22 = vld [vmem:[%s2 + $0x18] sm:$0xff]
    %v23 = vld [vmem:[%s2 + $0x20] sm:$0xff]
    %v24 = vld [vmem:[%s2 + $0x28] sm:$0xff]
    %v25 = vlaneseq
    %v26 = vand.u32 %v25, 127
    %v27 = vadd.s32 %v26, 128
    %vm28 = vcmp.lt.s32.totalorder %v26, 0
    %v29 = vsub.s32 0, %v26
    %v30 = vsel %vm28, %v29, %v26
    %v31 = vshrl.u32 %v30, 4
    %v32 = vand.u32 %v30, 15
    %v33 = vsub.s32 0, %v32
    %v34 = vsel %vm28, %v33, %v32
    %vm35 = vcmp.lt.s32.totalorder %v27, 0
    %v36 = vsub.s32 0, %v27
    %v37 = vsel %vm35, %v36, %v27
    %v38 = vshrl.u32 %v37, 4
    %v39 = vand.u32 %v37, 15
    %v40 = vsub.s32 0, %v39
    %v41 = vsel %vm35, %v40, %v39
    %vm42 = vcmp.ne.s32.totalorder %v34, 0
    %vm43 = vcmp.ne.s32.totalorder %v41, 0
    %vm44 = vcmp.lt.s32.totalorder %v34, 0
    %vm45 = vcmp.lt.s32.totalorder %v41, 0
    %vm46 = vmand %vm44, %vm42
    %vm47 = vmand %vm45, %vm43
    %v48 = vadd.s32 %v34, 16
    %v49 = vadd.s32 %v41, 16
    %v50 = vsel %vm46, %v48, %v34
    %v51 = vsel %vm47, %v49, %v41
    %vm52 = vcmp.ne.s32.totalorder %v50, 0
    %vm53 = vcmp.ne.s32.totalorder %v51, 0
    %v54 = vsel %vm52, 1, 0
    %v55 = vsel %vm53, 1, 0
    %v56 = vcvt.s32.f32 %v54
    %v57 = vcvt.s32.f32 %v55
    %vm58 = vcmp.ne.s32.totalorder %v50, 15
    %vm59 = vcmp.ne.s32.totalorder %v51, 15
    %v60 = vsel %vm58, 1, 0
    %v61 = vsel %vm59, 1, 0
    %v62 = vcvt.s32.f32 %v60
    %v63 = vcvt.s32.f32 %v61
    %64 = vrot.lane.b32.xlu0 %v15, 1
    %v65 = vpop.permute.xlu0 %64
    %66 = vrot.lane.b32.xlu0 %v16, 1
    %v67 = vpop.permute.xlu0 %66
    %vm68 = vcmp.lt.s32.totalorder %v26, 1
    %v69 = vsel %vm68, %v65, %v67
    %v70 = vsel %vm68, %v67, %v65
    %v71 = vmul.f32 %v70, %v56
    %v72 = vmul.f32 %v69, %v57
    %73 = vrot.lane.b32.xlu0 %v15, 127
    %v74 = vpop.permute.xlu0 %73
    %75 = vrot.lane.b32.xlu0 %v16, 127
    %v76 = vpop.permute.xlu0 %75
    %vm77 = vcmp.lt.s32.totalorder %v26, 127
    %v78 = vsel %vm77, %v74, %v76
    %v79 = vsel %vm77, %v76, %v74
    %v80 = vmul.f32 %v78, %v62
    %v81 = vmul.f32 %v79, %v63
    %83 = vset.pattern.permute.xlu0 0
    %84 = vperm.xlu0 %83, %v19
    %v85 = vpop.permute.xlu0 %84
    %vm87 = vcmask 195584
    %v89 = vsel %vm87, %v17, 0
    %v91 = vand.u32 %v72, 4294901760
    %92 = vmatprep.subr.mxu0 %v91
    %v93 = vand.u32 %v71, 4294901760
    %94 = vmatpush1.msra.mxu0 %v93
    %v95 = vand.u32 %v16, 4294901760
    %96 = vmatprep.subr.mxu0 %v95
    %v97 = vand.u32 %v15, 4294901760
    %98 = vmatpush1.msra.mxu0 %v97
    %v99 = vand.u32 %v81, 4294901760
    %100 = vmatprep.subr.mxu0 %v99
    %v101 = vand.u32 %v80, 4294901760
    %102 = vmatpush1.msra.mxu0 %v101
    %103 = vmatprep.subr.mxu0 0.0
    %104 = vmatpush1.msra.mxu0 0.0
    %105 = vmatprep.subr.mxu0 0.0
    %106 = vmatpush1.msra.mxu0 0.0
    %107 = vmatprep.subr.mxu0 0.0
    %108 = vmatpush1.msra.mxu0 0.0
    %109 = vmatprep.subr.mxu0 0.0
    %110 = vmatpush1.msra.mxu0 0.0
    %111 = vmatprep.subr.mxu0 0.0
    %112 = vmatpush1.msra.mxu0 0.0
    %113 = vmatprep.subr.mxu0 0.0
    %114 = vmatpush1.msra.mxu0 0.0
    %115 = vmatprep.subr.mxu0 0.0
    %116 = vmatpush1.msra.mxu0 0.0
    %117 = vmatprep.subr.mxu0 0.0
    %118 = vmatpush1.msra.mxu0 0.0
    %119 = vmatprep.subr.mxu0 0.0
    %120 = vmatpush1.msra.mxu0 0.0
    %121 = vmatprep.subr.mxu0 0.0
    %122 = vmatpush1.msra.mxu0 0.0
    %123 = vmatprep.subr.mxu0 0.0
    %124 = vmatpush1.msra.mxu0 0.0
    %125 = vmatprep.subr.mxu0 0.0
    %126 = vmatpush1.msra.mxu0 0.0
    %127 = vmatprep.subr.mxu0 0.0
    %128 = vmatpush1.msra.mxu0 0.0
    %129 = vmatprep.subr.mxu0 0.0
    %130 = vmatpush1.msra.mxu0 0.0
    %131 = vmatprep.subr.mxu0 0.0
    %132 = vmatpush1.msra.mxu0 0.0
    %133 = vmatprep.subr.mxu0 0.0
    %134 = vmatpush1.msra.mxu0 0.0
    %135 = vmatprep.subr.mxu0 0.0
    %136 = vmatpush1.msra.mxu0 0.0
    %137 = vmatprep.subr.mxu0 0.0
    %138 = vmatpush1.msra.mxu0 0.0
    %139 = vmatprep.subr.mxu0 0.0
    %140 = vmatpush1.msra.mxu0 0.0
    %141 = vmatprep.subr.mxu0 0.0
    %142 = vmatpush1.msra.mxu0 0.0
    %143 = vmatprep.subr.mxu0 0.0
    %144 = vmatpush1.msra.mxu0 0.0
    %145 = vmatprep.subr.mxu0 0.0
    %146 = vmatpush1.msra.mxu0 0.0
    %147 = vmatprep.subr.mxu0 0.0
    %148 = vmatpush1.msra.mxu0 0.0
    %149 = vmatprep.subr.mxu0 0.0
    %150 = vmatpush1.msra.mxu0 0.0
    %151 = vmatprep.subr.mxu0 0.0
    %152 = vmatpush1.msra.mxu0 0.0
    %153 = vmatprep.subr.mxu0 0.0
    %154 = vmatpush1.msra.mxu0 0.0
    %155 = vmatprep.subr.mxu0 0.0
    %156 = vmatpush1.msra.mxu0 0.0
    %157 = vmatprep.subr.mxu0 0.0
    %158 = vmatpush1.msra.mxu0 0.0
    %159 = vmatprep.subr.mxu0 0.0
    %160 = vmatpush1.msra.mxu0 0.0
    %161 = vmatprep.mubr.f32.mxu0 0.0
    %v162 = vand.u32 %v89, 4294901760
    %v163 = vsub.f32 %v89, %v162
    %v164 = vand.u32 %v163, 4294901760
    %v165 = vsub.f32 %v163, %v164
    %v166 = vand.u32 %v165, 4294901760
    %167 = vmatmul.mubr.f32.gmra.mrb[0].mxu0 %v166
    %v168 = vpop.f32.mrb[0].mxu0
    %v169 = vadd.f32 %v85, %v168
    %v170 = vpop.f32.mrb[0].mxu0
    %v171 = vadd.f32 %v85, %v170
    %172 = vdwg.mxu0
    %v173 = vand.u32 %v72, 4294901760
    %v174 = vsub.f32 %v72, %v173
    %v175 = vand.u32 %v174, 4294901760
    %v176 = vsub.f32 %v174, %v175
    %v177 = vand.u32 %v176, 4294901760
    %178 = vmatprep.subr.mxu0 %v177
    %v179 = vand.u32 %v71, 4294901760
    %v180 = vsub.f32 %v71, %v179
    %v181 = vand.u32 %v180, 4294901760
    %v182 = vsub.f32 %v180, %v181
    %v183 = vand.u32 %v182, 4294901760
    %184 = vmatpush1.msra.mxu0 %v183
    %v185 = vand.u32 %v16, 4294901760
    %v186 = vsub.f32 %v16, %v185
    %v187 = vand.u32 %v186, 4294901760
    %v188 = vsub.f32 %v186, %v187
    %v189 = vand.u32 %v188, 4294901760
    %190 = vmatprep.subr.mxu0 %v189
    %v191 = vand.u32 %v15, 4294901760
    %v192 = vsub.f32 %v15, %v191
    %v193 = vand.u32 %v192, 4294901760
    %v194 = vsub.f32 %v192, %v193
    %v195 = vand.u32 %v194, 4294901760
    %196 = vmatpush1.msra.mxu0 %v195
    %v197 = vand.u32 %v81, 4294901760
    %v198 = vsub.f32 %v81, %v197
    %v199 = vand.u32 %v198, 4294901760
    %v200 = vsub.f32 %v198, %v199
    %v201 = vand.u32 %v200, 4294901760
    %202 = vmatprep.subr.mxu0 %v201
    %v203 = vand.u32 %v80, 4294901760
    %v204 = vsub.f32 %v80, %v203
    %v205 = vand.u32 %v204, 4294901760
    %v206 = vsub.f32 %v204, %v205
    %v207 = vand.u32 %v206, 4294901760
    %208 = vmatpush1.msra.mxu0 %v207
    %209 = vmatprep.subr.mxu0 0.0
    %210 = vmatpush1.msra.mxu0 0.0
    %211 = vmatprep.subr.mxu0 0.0
    %212 = vmatpush1.msra.mxu0 0.0
    %213 = vmatprep.subr.mxu0 0.0
    %214 = vmatpush1.msra.mxu0 0.0
    %215 = vmatprep.subr.mxu0 0.0
    %216 = vmatpush1.msra.mxu0 0.0
    %217 = vmatprep.subr.mxu0 0.0
    %218 = vmatpush1.msra.mxu0 0.0
    %219 = vmatprep.subr.mxu0 0.0
    %220 = vmatpush1.msra.mxu0 0.0
    %221 = vmatprep.subr.mxu0 0.0
    %222 = vmatpush1.msra.mxu0 0.0
    %223 = vmatprep.subr.mxu0 0.0
    %224 = vmatpush1.msra.mxu0 0.0
    %225 = vmatprep.subr.mxu0 0.0
    %226 = vmatpush1.msra.mxu0 0.0
    %227 = vmatprep.subr.mxu0 0.0
    %228 = vmatpush1.msra.mxu0 0.0
    %229 = vmatprep.subr.mxu0 0.0
    %230 = vmatpush1.msra.mxu0 0.0
    %231 = vmatprep.subr.mxu0 0.0
    %232 = vmatpush1.msra.mxu0 0.0
    %233 = vmatprep.subr.mxu0 0.0
    %234 = vmatpush1.msra.mxu0 0.0
    %235 = vmatprep.subr.mxu0 0.0
    %236 = vmatpush1.msra.mxu0 0.0
    %237 = vmatprep.subr.mxu0 0.0
    %238 = vmatpush1.msra.mxu0 0.0
    %239 = vmatprep.subr.mxu0 0.0
    %240 = vmatpush1.msra.mxu0 0.0
    %241 = vmatprep.subr.mxu0 0.0
    %242 = vmatpush1.msra.mxu0 0.0
    %243 = vmatprep.subr.mxu0 0.0
    %244 = vmatpush1.msra.mxu0 0.0
    %245 = vmatprep.subr.mxu0 0.0
    %246 = vmatpush1.msra.mxu0 0.0
    %247 = vmatprep.subr.mxu0 0.0
    %248 = vmatpush1.msra.mxu0 0.0
    %249 = vmatprep.subr.mxu0 0.0
    %250 = vmatpush1.msra.mxu0 0.0
    %251 = vmatprep.subr.mxu0 0.0
    %252 = vmatpush1.msra.mxu0 0.0
    %253 = vmatprep.subr.mxu0 0.0
    %254 = vmatpush1.msra.mxu0 0.0
    %255 = vmatprep.subr.mxu0 0.0
    %256 = vmatpush1.msra.mxu0 0.0
    %257 = vmatprep.subr.mxu0 0.0
    %258 = vmatpush1.msra.mxu0 0.0
    %259 = vmatprep.subr.mxu0 0.0
    %260 = vmatpush1.msra.mxu0 0.0
    %261 = vmatprep.subr.mxu0 0.0
    %262 = vmatpush1.msra.mxu0 0.0
    %263 = vmatprep.subr.mxu0 0.0
    %264 = vmatpush1.msra.mxu0 0.0
    %265 = vmatprep.subr.mxu0 0.0
    %266 = vmatpush1.msra.mxu0 0.0
    %267 = vmatprep.mubr.f32.mxu0 0.0
    %v268 = vand.u32 %v89, 4294901760
    %269 = vmatmul.mubr.f32.gmra.mrb[0].mxu0 %v268
    %v270 = vpop.f32.mrb[0].mxu0
    %v271 = vadd.f32 %v169, %v270
    %v272 = vpop.f32.mrb[0].mxu0
    %v273 = vadd.f32 %v171, %v272
    %274 = vdwg.mxu0
    %v275 = vand.u32 %v72, 4294901760
    %v276 = vsub.f32 %v72, %v275
    %277 = vmatprep.subr.mxu0 %v276
    %v278 = vand.u32 %v71, 4294901760
    %v279 = vsub.f32 %v71, %v278
    %280 = vmatpush1.msra.mxu0 %v279
    %v281 = vand.u32 %v16, 4294901760
    %v282 = vsub.f32 %v16, %v281
    %283 = vmatprep.subr.mxu0 %v282
    %v284 = vand.u32 %v15, 4294901760
    %v285 = vsub.f32 %v15, %v284
    %286 = vmatpush1.msra.mxu0 %v285
    %v287 = vand.u32 %v81, 4294901760
    %v288 = vsub.f32 %v81, %v287
    %289 = vmatprep.subr.mxu0 %v288
    %v290 = vand.u32 %v80, 4294901760
    %v291 = vsub.f32 %v80, %v290
    %292 = vmatpush1.msra.mxu0 %v291
    %293 = vmatprep.subr.mxu0 0.0
    %294 = vmatpush1.msra.mxu0 0.0
    %295 = vmatprep.subr.mxu0 0.0
    %296 = vmatpush1.msra.mxu0 0.0
    %297 = vmatprep.subr.mxu0 0.0
    %298 = vmatpush1.msra.mxu0 0.0
    %299 = vmatprep.subr.mxu0 0.0
    %300 = vmatpush1.msra.mxu0 0.0
    %301 = vmatprep.subr.mxu0 0.0
    %302 = vmatpush1.msra.mxu0 0.0
    %303 = vmatprep.subr.mxu0 0.0
    %304 = vmatpush1.msra.mxu0 0.0
    %305 = vmatprep.subr.mxu0 0.0
    %306 = vmatpush1.msra.mxu0 0.0
    %307 = vmatprep.subr.mxu0 0.0
    %308 = vmatpush1.msra.mxu0 0.0
    %309 = vmatprep.subr.mxu0 0.0
    %310 = vmatpush1.msra.mxu0 0.0
    %311 = vmatprep.subr.mxu0 0.0
    %312 = vmatpush1.msra.mxu0 0.0
    %313 = vmatprep.subr.mxu0 0.0
    %314 = vmatpush1.msra.mxu0 0.0
    %315 = vmatprep.subr.mxu0 0.0
    %316 = vmatpush1.msra.mxu0 0.0
    %317 = vmatprep.subr.mxu0 0.0
    %318 = vmatpush1.msra.mxu0 0.0
    %319 = vmatprep.subr.mxu0 0.0
    %320 = vmatpush1.msra.mxu0 0.0
    %321 = vmatprep.subr.mxu0 0.0
    %322 = vmatpush1.msra.mxu0 0.0
    %323 = vmatprep.subr.mxu0 0.0
    %324 = vmatpush1.msra.mxu0 0.0
    %325 = vmatprep.subr.mxu0 0.0
    %326 = vmatpush1.msra.mxu0 0.0
    %327 = vmatprep.subr.mxu0 0.0
    %328 = vmatpush1.msra.mxu0 0.0
    %329 = vmatprep.subr.mxu0 0.0
    %330 = vmatpush1.msra.mxu0 0.0
    %331 = vmatprep.subr.mxu0 0.0
    %332 = vmatpush1.msra.mxu0 0.0
    %333 = vmatprep.subr.mxu0 0.0
    %334 = vmatpush1.msra.mxu0 0.0
    %335 = vmatprep.subr.mxu0 0.0
    %336 = vmatpush1.msra.mxu0 0.0
    %337 = vmatprep.subr.mxu0 0.0
    %338 = vmatpush1.msra.mxu0 0.0
    %339 = vmatprep.subr.mxu0 0.0
    %340 = vmatpush1.msra.mxu0 0.0
    %341 = vmatprep.subr.mxu0 0.0
    %342 = vmatpush1.msra.mxu0 0.0
    %343 = vmatprep.subr.mxu0 0.0
    %344 = vmatpush1.msra.mxu0 0.0
    %345 = vmatprep.subr.mxu0 0.0
    %346 = vmatpush1.msra.mxu0 0.0
    %347 = vmatprep.subr.mxu0 0.0
    %348 = vmatpush1.msra.mxu0 0.0
    %349 = vmatprep.subr.mxu0 0.0
    %350 = vmatpush1.msra.mxu0 0.0
    %351 = vmatprep.mubr.f32.mxu0 0.0
    %v352 = vand.u32 %v89, 4294901760
    %v353 = vsub.f32 %v89, %v352
    %354 = vmatmul.mubr.f32.gmra.mrb[0].mxu0 %v353
    %v355 = vpop.f32.mrb[0].mxu0
    %v356 = vadd.f32 %v271, %v355
    %v357 = vpop.f32.mrb[0].mxu0
    %v358 = vadd.f32 %v273, %v357
    %359 = vdwg.mxu0
    %v360 = vand.u32 %v72, 4294901760
    %361 = vmatprep.subr.mxu0 %v360
    %v362 = vand.u32 %v71, 4294901760
    %363 = vmatpush1.msra.mxu0 %v362
    %v364 = vand.u32 %v16, 4294901760
    %365 = vmatprep.subr.mxu0 %v364
    %v366 = vand.u32 %v15, 4294901760
    %367 = vmatpush1.msra.mxu0 %v366
    %v368 = vand.u32 %v81, 4294901760
    %369 = vmatprep.subr.mxu0 %v368
    %v370 = vand.u32 %v80, 4294901760
    %371 = vmatpush1.msra.mxu0 %v370
    %372 = vmatprep.subr.mxu0 0.0
    %373 = vmatpush1.msra.mxu0 0.0
    %374 = vmatprep.subr.mxu0 0.0
    %375 = vmatpush1.msra.mxu0 0.0
    %376 = vmatprep.subr.mxu0 0.0
    %377 = vmatpush1.msra.mxu0 0.0
    %378 = vmatprep.subr.mxu0 0.0
    %379 = vmatpush1.msra.mxu0 0.0
    %380 = vmatprep.subr.mxu0 0.0
    %381 = vmatpush1.msra.mxu0 0.0
    %382 = vmatprep.subr.mxu0 0.0
    %383 = vmatpush1.msra.mxu0 0.0
    %384 = vmatprep.subr.mxu0 0.0
    %385 = vmatpush1.msra.mxu0 0.0
    %386 = vmatprep.subr.mxu0 0.0
    %387 = vmatpush1.msra.mxu0 0.0
    %388 = vmatprep.subr.mxu0 0.0
    %389 = vmatpush1.msra.mxu0 0.0
    %390 = vmatprep.subr.mxu0 0.0
    %391 = vmatpush1.msra.mxu0 0.0
    %392 = vmatprep.subr.mxu0 0.0
    %393 = vmatpush1.msra.mxu0 0.0
    %394 = vmatprep.subr.mxu0 0.0
    %395 = vmatpush1.msra.mxu0 0.0
    %396 = vmatprep.subr.mxu0 0.0
    %397 = vmatpush1.msra.mxu0 0.0
    %398 = vmatprep.subr.mxu0 0.0
    %399 = vmatpush1.msra.mxu0 0.0
    %400 = vmatprep.subr.mxu0 0.0
    %401 = vmatpush1.msra.mxu0 0.0
    %402 = vmatprep.subr.mxu0 0.0
    %403 = vmatpush1.msra.mxu0 0.0
    %404 = vmatprep.subr.mxu0 0.0
    %405 = vmatpush1.msra.mxu0 0.0
    %406 = vmatprep.subr.mxu0 0.0
    %407 = vmatpush1.msra.mxu0 0.0
    %408 = vmatprep.subr.mxu0 0.0
    %409 = vmatpush1.msra.mxu0 0.0
    %410 = vmatprep.subr.mxu0 0.0
    %411 = vmatpush1.msra.mxu0 0.0
    %412 = vmatprep.subr.mxu0 0.0
    %413 = vmatpush1.msra.mxu0 0.0
    %414 = vmatprep.subr.mxu0 0.0
    %415 = vmatpush1.msra.mxu0 0.0
    %416 = vmatprep.subr.mxu0 0.0
    %417 = vmatpush1.msra.mxu0 0.0
    %418 = vmatprep.subr.mxu0 0.0
    %419 = vmatpush1.msra.mxu0 0.0
    %420 = vmatprep.subr.mxu0 0.0
    %421 = vmatpush1.msra.mxu0 0.0
    %422 = vmatprep.subr.mxu0 0.0
    %423 = vmatpush1.msra.mxu0 0.0
    %424 = vmatprep.subr.mxu0 0.0
    %425 = vmatpush1.msra.mxu0 0.0
    %426 = vmatprep.subr.mxu0 0.0
    %427 = vmatpush1.msra.mxu0 0.0
    %428 = vmatprep.subr.mxu0 0.0
    %429 = vmatpush1.msra.mxu0 0.0
    %430 = vmatprep.mubr.f32.mxu0 0.0
    %v431 = vand.u32 %v89, 4294901760
    %v432 = vsub.f32 %v89, %v431
    %v433 = vand.u32 %v432, 4294901760
    %434 = vmatmul.mubr.f32.gmra.mrb[0].mxu0 %v433
    %v435 = vpop.f32.mrb[0].mxu0
    %v436 = vadd.f32 %v356, %v435
    %v437 = vpop.f32.mrb[0].mxu0
    %v438 = vadd.f32 %v358, %v437
    %439 = vdwg.mxu0
    %v440 = vand.u32 %v72, 4294901760
    %v441 = vsub.f32 %v72, %v440
    %v442 = vand.u32 %v441, 4294901760
    %443 = vmatprep.subr.mxu0 %v442
    %v444 = vand.u32 %v71, 4294901760
    %v445 = vsub.f32 %v71, %v444
    %v446 = vand.u32 %v445, 4294901760
    %447 = vmatpush1.msra.mxu0 %v446
    %v448 = vand.u32 %v16, 4294901760
    %v449 = vsub.f32 %v16, %v448
    %v450 = vand.u32 %v449, 4294901760
    %451 = vmatprep.subr.mxu0 %v450
    %v452 = vand.u32 %v15, 4294901760
    %v453 = vsub.f32 %v15, %v452
    %v454 = vand.u32 %v453, 4294901760
    %455 = vmatpush1.msra.mxu0 %v454
    %v456 = vand.u32 %v81, 4294901760
    %v457 = vsub.f32 %v81, %v456
    %v458 = vand.u32 %v457, 4294901760
    %459 = vmatprep.subr.mxu0 %v458
    %v460 = vand.u32 %v80, 4294901760
    %v461 = vsub.f32 %v80, %v460
    %v462 = vand.u32 %v461, 4294901760
    %463 = vmatpush1.msra.mxu0 %v462
    %464 = vmatprep.subr.mxu0 0.0
    %465 = vmatpush1.msra.mxu0 0.0
    %466 = vmatprep.subr.mxu0 0.0
    %467 = vmatpush1.msra.mxu0 0.0
    %468 = vmatprep.subr.mxu0 0.0
    %469 = vmatpush1.msra.mxu0 0.0
    %470 = vmatprep.subr.mxu0 0.0
    %471 = vmatpush1.msra.mxu0 0.0
    %472 = vmatprep.subr.mxu0 0.0
    %473 = vmatpush1.msra.mxu0 0.0
    %474 = vmatprep.subr.mxu0 0.0
    %475 = vmatpush1.msra.mxu0 0.0
    %476 = vmatprep.subr.mxu0 0.0
    %477 = vmatpush1.msra.mxu0 0.0
    %478 = vmatprep.subr.mxu0 0.0
    %479 = vmatpush1.msra.mxu0 0.0
    %480 = vmatprep.subr.mxu0 0.0
    %481 = vmatpush1.msra.mxu0 0.0
    %482 = vmatprep.subr.mxu0 0.0
    %483 = vmatpush1.msra.mxu0 0.0
    %484 = vmatprep.subr.mxu0 0.0
    %485 = vmatpush1.msra.mxu0 0.0
    %486 = vmatprep.subr.mxu0 0.0
    %487 = vmatpush1.msra.mxu0 0.0
    %488 = vmatprep.subr.mxu0 0.0
    %489 = vmatpush1.msra.mxu0 0.0
    %490 = vmatprep.subr.mxu0 0.0
    %491 = vmatpush1.msra.mxu0 0.0
    %492 = vmatprep.subr.mxu0 0.0
    %493 = vmatpush1.msra.mxu0 0.0
    %494 = vmatprep.subr.mxu0 0.0
    %495 = vmatpush1.msra.mxu0 0.0
    %496 = vmatprep.subr.mxu0 0.0
    %497 = vmatpush1.msra.mxu0 0.0
    %498 = vmatprep.subr.mxu0 0.0
    %499 = vmatpush1.msra.mxu0 0.0
    %500 = vmatprep.subr.mxu0 0.0
    %501 = vmatpush1.msra.mxu0 0.0
    %502 = vmatprep.subr.mxu0 0.0
    %503 = vmatpush1.msra.mxu0 0.0
    %504 = vmatprep.subr.mxu0 0.0
    %505 = vmatpush1.msra.mxu0 0.0
    %506 = vmatprep.subr.mxu0 0.0
    %507 = vmatpush1.msra.mxu0 0.0
    %508 = vmatprep.subr.mxu0 0.0
    %509 = vmatpush1.msra.mxu0 0.0
    %510 = vmatprep.subr.mxu0 0.0
    %511 = vmatpush1.msra.mxu0 0.0
    %512 = vmatprep.subr.mxu0 0.0
    %513 = vmatpush1.msra.mxu0 0.0
    %514 = vmatprep.subr.mxu0 0.0
    %515 = vmatpush1.msra.mxu0 0.0
    %516 = vmatprep.subr.mxu0 0.0
    %517 = vmatpush1.msra.mxu0 0.0
    %518 = vmatprep.subr.mxu0 0.0
    %519 = vmatpush1.msra.mxu0 0.0
    %520 = vmatprep.subr.mxu0 0.0
    %521 = vmatpush1.msra.mxu0 0.0
    %522 = vmatprep.mubr.f32.mxu0 0.0
    %v523 = vand.u32 %v89, 4294901760
    %524 = vmatmul.mubr.f32.gmra.mrb[0].mxu0 %v523
    %v525 = vpop.f32.mrb[0].mxu0
    %v526 = vadd.f32 %v436, %v525
    %v527 = vpop.f32.mrb[0].mxu0
    %v528 = vadd.f32 %v438, %v527
    %529 = vdwg.mxu0
    %v530 = vand.u32 %v72, 4294901760
    %531 = vmatprep.subr.mxu0 %v530
    %v532 = vand.u32 %v71, 4294901760
    %533 = vmatpush1.msra.mxu0 %v532
    %v534 = vand.u32 %v16, 4294901760
    %535 = vmatprep.subr.mxu0 %v534
    %v536 = vand.u32 %v15, 4294901760
    %537 = vmatpush1.msra.mxu0 %v536
    %v538 = vand.u32 %v81, 4294901760
    %539 = vmatprep.subr.mxu0 %v538
    %v540 = vand.u32 %v80, 4294901760
    %541 = vmatpush1.msra.mxu0 %v540
    %542 = vmatprep.subr.mxu0 0.0
    %543 = vmatpush1.msra.mxu0 0.0
    %544 = vmatprep.subr.mxu0 0.0
    %545 = vmatpush1.msra.mxu0 0.0
    %546 = vmatprep.subr.mxu0 0.0
    %547 = vmatpush1.msra.mxu0 0.0
    %548 = vmatprep.subr.mxu0 0.0
    %549 = vmatpush1.msra.mxu0 0.0
    %550 = vmatprep.subr.mxu0 0.0
    %551 = vmatpush1.msra.mxu0 0.0
    %552 = vmatprep.subr.mxu0 0.0
    %553 = vmatpush1.msra.mxu0 0.0
    %554 = vmatprep.subr.mxu0 0.0
    %555 = vmatpush1.msra.mxu0 0.0
    %556 = vmatprep.subr.mxu0 0.0
    %557 = vmatpush1.msra.mxu0 0.0
    %558 = vmatprep.subr.mxu0 0.0
    %559 = vmatpush1.msra.mxu0 0.0
    %560 = vmatprep.subr.mxu0 0.0
    %561 = vmatpush1.msra.mxu0 0.0
    %562 = vmatprep.subr.mxu0 0.0
    %563 = vmatpush1.msra.mxu0 0.0
    %564 = vmatprep.subr.mxu0 0.0
    %565 = vmatpush1.msra.mxu0 0.0
    %566 = vmatprep.subr.mxu0 0.0
    %567 = vmatpush1.msra.mxu0 0.0
    %568 = vmatprep.subr.mxu0 0.0
    %569 = vmatpush1.msra.mxu0 0.0
    %570 = vmatprep.subr.mxu0 0.0
    %571 = vmatpush1.msra.mxu0 0.0
    %572 = vmatprep.subr.mxu0 0.0
    %573 = vmatpush1.msra.mxu0 0.0
    %574 = vmatprep.subr.mxu0 0.0
    %575 = vmatpush1.msra.mxu0 0.0
    %576 = vmatprep.subr.mxu0 0.0
    %577 = vmatpush1.msra.mxu0 0.0
    %578 = vmatprep.subr.mxu0 0.0
    %579 = vmatpush1.msra.mxu0 0.0
    %580 = vmatprep.subr.mxu0 0.0
    %581 = vmatpush1.msra.mxu0 0.0
    %582 = vmatprep.subr.mxu0 0.0
    %583 = vmatpush1.msra.mxu0 0.0
    %584 = vmatprep.subr.mxu0 0.0
    %585 = vmatpush1.msra.mxu0 0.0
    %586 = vmatprep.subr.mxu0 0.0
    %587 = vmatpush1.msra.mxu0 0.0
    %588 = vmatprep.subr.mxu0 0.0
    %589 = vmatpush1.msra.mxu0 0.0
    %590 = vmatprep.subr.mxu0 0.0
    %591 = vmatpush1.msra.mxu0 0.0
    %592 = vmatprep.subr.mxu0 0.0
    %593 = vmatpush1.msra.mxu0 0.0
    %594 = vmatprep.subr.mxu0 0.0
    %595 = vmatpush1.msra.mxu0 0.0
    %596 = vmatprep.subr.mxu0 0.0
    %597 = vmatpush1.msra.mxu0 0.0
    %598 = vmatprep.subr.mxu0 0.0
    %599 = vmatpush1.msra.mxu0 0.0
    %600 = vmatprep.mubr.f32.mxu0 0.0
    %v601 = vand.u32 %v89, 4294901760
    %602 = vmatmul.mubr.f32.gmra.mrb[0].mxu0 %v601
    %v603 = vpop.f32.mrb[0].mxu0
    %v604 = vadd.f32 %v526, %v603
    %v605 = vpop.f32.mrb[0].mxu0
    %v606 = vadd.f32 %v528, %v605
    %607 = vdwg.mxu0
    %v608 = vadd.f32 %v604, %v606
    %609 = vadd.xlane.f32.xlu0 %v608
    %v610 = vpop.xlane.xlu0 %609
    %v611 = vrcp.pop 256.0
    %v612 = vmul.f32 %v610, %v611
    %v613 = vmul.f32 %v604, %v604
    %v614 = vmul.f32 %v606, %v606
    %v615 = vadd.f32 %v613, %v614
    %616 = vadd.xlane.f32.xlu0 %v615
    %v617 = vpop.xlane.xlu0 %616
    %v618 = vmul.f32 %v617, %v611
    %v619 = vmul.f32 %v612, %v612
    %v620 = vsub.f32 %v618, %v619
    %v621 = vadd.f32 %v620, 1e-05
    %v622 = vrsqrt.pop %v621
    %v623 = vsub.f32 %v604, %v612
    %v624 = vsub.f32 %v606, %v612
    %v625 = vmul.f32 %v623, %v622
    %v626 = vmul.f32 %v624, %v622
    %v627 = vmul.f32 %v620, %v622
    %v628 = vmul.f32 %v627, %v622
    %v629 = vadd.f32 %v628, 0.0
    %v631 = vrot.slane %v628, 4
    %v633 = vadd.f32 %v629, %v631
    %v634 = vrcp.pop 2.0
    %v635 = vmul.f32 %v633, %v634
    %v637 = vrot.slane %v635, 4
    %vm639 = vcmask 1043456
    %v640 = vsel %vm639, %v635, %v637
    %v641 = vadd.f32 %v640, 1e-05
    %v642 = vrsqrt.pop %v641
    %644 = vset.pattern.permute.xlu0 0
    %645 = vperm.xlu0 %644, %v642
    %v646 = vpop.permute.xlu0 %645
    %v648 = vmul.f32 %v625, %v646
    %v649 = vmul.f32 %v626, %v646
    %651 = vset.pattern.permute.xlu0 0
    %652 = vperm.xlu0 %651, %v20
    %v653 = vpop.permute.xlu0 %652
    %v655 = vmul.f32 %v648, %v653
    %v656 = vmul.f32 %v649, %v653
    %658 = vset.pattern.permute.xlu0 0
    %659 = vperm.xlu0 %658, %v21
    %v660 = vpop.permute.xlu0 %659
    %v662 = vadd.f32 %v655, %v660
    %v663 = vadd.f32 %v656, %v660
    %v664 = vmax.f32 %v662, 0.0
    %v665 = vmax.f32 %v663, 0.0
    %666 = vrot.lane.b32.xlu0 %v664, 1
    %v667 = vpop.permute.xlu0 %666
    %668 = vrot.lane.b32.xlu0 %v665, 1
    %v669 = vpop.permute.xlu0 %668
    %v670 = vsel %vm68, %v667, %v669
    %v671 = vsel %vm68, %v669, %v667
    %v672 = vmul.f32 %v671, %v56
    %v673 = vmul.f32 %v670, %v57
    %674 = vrot.lane.b32.xlu0 %v664, 127
    %v675 = vpop.permute.xlu0 %674
    %676 = vrot.lane.b32.xlu0 %v665, 127
    %v677 = vpop.permute.xlu0 %676
    %v678 = vsel %vm77, %v675, %v677
    %v679 = vsel %vm77, %v677, %v675
    %v680 = vmul.f32 %v678, %v62
    %v681 = vmul.f32 %v679, %v63
    %683 = vset.pattern.permute.xlu0 0
    %684 = vperm.xlu0 %683, %v22
    %v685 = vpop.permute.xlu0 %684
    %v688 = vsel %vm87, %v18, 0
    %v690 = vand.u32 %v673, 4294901760
    %691 = vmatprep.subr.mxu0 %v690
    %v692 = vand.u32 %v672, 4294901760
    %693 = vmatpush1.msra.mxu0 %v692
    %v694 = vand.u32 %v665, 4294901760
    %695 = vmatprep.subr.mxu0 %v694
    %v696 = vand.u32 %v664, 4294901760
    %697 = vmatpush1.msra.mxu0 %v696
    %v698 = vand.u32 %v681, 4294901760
    %699 = vmatprep.subr.mxu0 %v698
    %v700 = vand.u32 %v680, 4294901760
    %701 = vmatpush1.msra.mxu0 %v700
    %702 = vmatprep.subr.mxu0 0.0
    %703 = vmatpush1.msra.mxu0 0.0
    %704 = vmatprep.subr.mxu0 0.0
    %705 = vmatpush1.msra.mxu0 0.0
    %706 = vmatprep.subr.mxu0 0.0
    %707 = vmatpush1.msra.mxu0 0.0
    %708 = vmatprep.subr.mxu0 0.0
    %709 = vmatpush1.msra.mxu0 0.0
    %710 = vmatprep.subr.mxu0 0.0
    %711 = vmatpush1.msra.mxu0 0.0
    %712 = vmatprep.subr.mxu0 0.0
    %713 = vmatpush1.msra.mxu0 0.0
    %714 = vmatprep.subr.mxu0 0.0
    %715 = vmatpush1.msra.mxu0 0.0
    %716 = vmatprep.subr.mxu0 0.0
    %717 = vmatpush1.msra.mxu0 0.0
    %718 = vmatprep.subr.mxu0 0.0
    %719 = vmatpush1.msra.mxu0 0.0
    %720 = vmatprep.subr.mxu0 0.0
    %721 = vmatpush1.msra.mxu0 0.0
    %722 = vmatprep.subr.mxu0 0.0
    %723 = vmatpush1.msra.mxu0 0.0
    %724 = vmatprep.subr.mxu0 0.0
    %725 = vmatpush1.msra.mxu0 0.0
    %726 = vmatprep.subr.mxu0 0.0
    %727 = vmatpush1.msra.mxu0 0.0
    %728 = vmatprep.subr.mxu0 0.0
    %729 = vmatpush1.msra.mxu0 0.0
    %730 = vmatprep.subr.mxu0 0.0
    %731 = vmatpush1.msra.mxu0 0.0
    %732 = vmatprep.subr.mxu0 0.0
    %733 = vmatpush1.msra.mxu0 0.0
    %734 = vmatprep.subr.mxu0 0.0
    %735 = vmatpush1.msra.mxu0 0.0
    %736 = vmatprep.subr.mxu0 0.0
    %737 = vmatpush1.msra.mxu0 0.0
    %738 = vmatprep.subr.mxu0 0.0
    %739 = vmatpush1.msra.mxu0 0.0
    %740 = vmatprep.subr.mxu0 0.0
    %741 = vmatpush1.msra.mxu0 0.0
    %742 = vmatprep.subr.mxu0 0.0
    %743 = vmatpush1.msra.mxu0 0.0
    %744 = vmatprep.subr.mxu0 0.0
    %745 = vmatpush1.msra.mxu0 0.0
    %746 = vmatprep.subr.mxu0 0.0
    %747 = vmatpush1.msra.mxu0 0.0
    %748 = vmatprep.subr.mxu0 0.0
    %749 = vmatpush1.msra.mxu0 0.0
    %750 = vmatprep.subr.mxu0 0.0
    %751 = vmatpush1.msra.mxu0 0.0
    %752 = vmatprep.subr.mxu0 0.0
    %753 = vmatpush1.msra.mxu0 0.0
    %754 = vmatprep.subr.mxu0 0.0
    %755 = vmatpush1.msra.mxu0 0.0
    %756 = vmatprep.subr.mxu0 0.0
    %757 = vmatpush1.msra.mxu0 0.0
    %758 = vmatprep.subr.mxu0 0.0
    %759 = vmatpush1.msra.mxu0 0.0
    %760 = vmatprep.mubr.f32.mxu0 0.0
    %v761 = vand.u32 %v688, 4294901760
    %v762 = vsub.f32 %v688, %v761
    %v763 = vand.u32 %v762, 4294901760
    %v764 = vsub.f32 %v762, %v763
    %v765 = vand.u32 %v764, 4294901760
    %766 = vmatmul.mubr.f32.gmra.mrb[0].mxu0 %v765
    %v767 = vpop.f32.mrb[0].mxu0
    %v768 = vadd.f32 %v685, %v767
    %v769 = vpop.f32.mrb[0].mxu0
    %v770 = vadd.f32 %v685, %v769
    %771 = vdwg.mxu0
    %v772 = vand.u32 %v673, 4294901760
    %v773 = vsub.f32 %v673, %v772
    %v774 = vand.u32 %v773, 4294901760
    %v775 = vsub.f32 %v773, %v774
    %v776 = vand.u32 %v775, 4294901760
    %777 = vmatprep.subr.mxu0 %v776
    %v778 = vand.u32 %v672, 4294901760
    %v779 = vsub.f32 %v672, %v778
    %v780 = vand.u32 %v779, 4294901760
    %v781 = vsub.f32 %v779, %v780
    %v782 = vand.u32 %v781, 4294901760
    %783 = vmatpush1.msra.mxu0 %v782
    %v784 = vand.u32 %v665, 4294901760
    %v785 = vsub.f32 %v665, %v784
    %v786 = vand.u32 %v785, 4294901760
    %v787 = vsub.f32 %v785, %v786
    %v788 = vand.u32 %v787, 4294901760
    %789 = vmatprep.subr.mxu0 %v788
    %v790 = vand.u32 %v664, 4294901760
    %v791 = vsub.f32 %v664, %v790
    %v792 = vand.u32 %v791, 4294901760
    %v793 = vsub.f32 %v791, %v792
    %v794 = vand.u32 %v793, 4294901760
    %795 = vmatpush1.msra.mxu0 %v794
    %v796 = vand.u32 %v681, 4294901760
    %v797 = vsub.f32 %v681, %v796
    %v798 = vand.u32 %v797, 4294901760
    %v799 = vsub.f32 %v797, %v798
    %v800 = vand.u32 %v799, 4294901760
    %801 = vmatprep.subr.mxu0 %v800
    %v802 = vand.u32 %v680, 4294901760
    %v803 = vsub.f32 %v680, %v802
    %v804 = vand.u32 %v803, 4294901760
    %v805 = vsub.f32 %v803, %v804
    %v806 = vand.u32 %v805, 4294901760
    %807 = vmatpush1.msra.mxu0 %v806
    %808 = vmatprep.subr.mxu0 0.0
    %809 = vmatpush1.msra.mxu0 0.0
    %810 = vmatprep.subr.mxu0 0.0
    %811 = vmatpush1.msra.mxu0 0.0
    %812 = vmatprep.subr.mxu0 0.0
    %813 = vmatpush1.msra.mxu0 0.0
    %814 = vmatprep.subr.mxu0 0.0
    %815 = vmatpush1.msra.mxu0 0.0
    %816 = vmatprep.subr.mxu0 0.0
    %817 = vmatpush1.msra.mxu0 0.0
    %818 = vmatprep.subr.mxu0 0.0
    %819 = vmatpush1.msra.mxu0 0.0
    %820 = vmatprep.subr.mxu0 0.0
    %821 = vmatpush1.msra.mxu0 0.0
    %822 = vmatprep.subr.mxu0 0.0
    %823 = vmatpush1.msra.mxu0 0.0
    %824 = vmatprep.subr.mxu0 0.0
    %825 = vmatpush1.msra.mxu0 0.0
    %826 = vmatprep.subr.mxu0 0.0
    %827 = vmatpush1.msra.mxu0 0.0
    %828 = vmatprep.subr.mxu0 0.0
    %829 = vmatpush1.msra.mxu0 0.0
    %830 = vmatprep.subr.mxu0 0.0
    %831 = vmatpush1.msra.mxu0 0.0
    %832 = vmatprep.subr.mxu0 0.0
    %833 = vmatpush1.msra.mxu0 0.0
    %834 = vmatprep.subr.mxu0 0.0
    %835 = vmatpush1.msra.mxu0 0.0
    %836 = vmatprep.subr.mxu0 0.0
    %837 = vmatpush1.msra.mxu0 0.0
    %838 = vmatprep.subr.mxu0 0.0
    %839 = vmatpush1.msra.mxu0 0.0
    %840 = vmatprep.subr.mxu0 0.0
    %841 = vmatpush1.msra.mxu0 0.0
    %842 = vmatprep.subr.mxu0 0.0
    %843 = vmatpush1.msra.mxu0 0.0
    %844 = vmatprep.subr.mxu0 0.0
    %845 = vmatpush1.msra.mxu0 0.0
    %846 = vmatprep.subr.mxu0 0.0
    %847 = vmatpush1.msra.mxu0 0.0
    %848 = vmatprep.subr.mxu0 0.0
    %849 = vmatpush1.msra.mxu0 0.0
    %850 = vmatprep.subr.mxu0 0.0
    %851 = vmatpush1.msra.mxu0 0.0
    %852 = vmatprep.subr.mxu0 0.0
    %853 = vmatpush1.msra.mxu0 0.0
    %854 = vmatprep.subr.mxu0 0.0
    %855 = vmatpush1.msra.mxu0 0.0
    %856 = vmatprep.subr.mxu0 0.0
    %857 = vmatpush1.msra.mxu0 0.0
    %858 = vmatprep.subr.mxu0 0.0
    %859 = vmatpush1.msra.mxu0 0.0
    %860 = vmatprep.subr.mxu0 0.0
    %861 = vmatpush1.msra.mxu0 0.0
    %862 = vmatprep.subr.mxu0 0.0
    %863 = vmatpush1.msra.mxu0 0.0
    %864 = vmatprep.subr.mxu0 0.0
    %865 = vmatpush1.msra.mxu0 0.0
    %866 = vmatprep.mubr.f32.mxu0 0.0
    %v867 = vand.u32 %v688, 4294901760
    %868 = vmatmul.mubr.f32.gmra.mrb[0].mxu0 %v867
    %v869 = vpop.f32.mrb[0].mxu0
    %v870 = vadd.f32 %v768, %v869
    %v871 = vpop.f32.mrb[0].mxu0
    %v872 = vadd.f32 %v770, %v871
    %873 = vdwg.mxu0
    %v874 = vand.u32 %v673, 4294901760
    %v875 = vsub.f32 %v673, %v874
    %876 = vmatprep.subr.mxu0 %v875
    %v877 = vand.u32 %v672, 4294901760
    %v878 = vsub.f32 %v672, %v877
    %879 = vmatpush1.msra.mxu0 %v878
    %v880 = vand.u32 %v665, 4294901760
    %v881 = vsub.f32 %v665, %v880
    %882 = vmatprep.subr.mxu0 %v881
    %v883 = vand.u32 %v664, 4294901760
    %v884 = vsub.f32 %v664, %v883
    %885 = vmatpush1.msra.mxu0 %v884
    %v886 = vand.u32 %v681, 4294901760
    %v887 = vsub.f32 %v681, %v886
    %888 = vmatprep.subr.mxu0 %v887
    %v889 = vand.u32 %v680, 4294901760
    %v890 = vsub.f32 %v680, %v889
    %891 = vmatpush1.msra.mxu0 %v890
    %892 = vmatprep.subr.mxu0 0.0
    %893 = vmatpush1.msra.mxu0 0.0
    %894 = vmatprep.subr.mxu0 0.0
    %895 = vmatpush1.msra.mxu0 0.0
    %896 = vmatprep.subr.mxu0 0.0
    %897 = vmatpush1.msra.mxu0 0.0
    %898 = vmatprep.subr.mxu0 0.0
    %899 = vmatpush1.msra.mxu0 0.0
    %900 = vmatprep.subr.mxu0 0.0
    %901 = vmatpush1.msra.mxu0 0.0
    %902 = vmatprep.subr.mxu0 0.0
    %903 = vmatpush1.msra.mxu0 0.0
    %904 = vmatprep.subr.mxu0 0.0
    %905 = vmatpush1.msra.mxu0 0.0
    %906 = vmatprep.subr.mxu0 0.0
    %907 = vmatpush1.msra.mxu0 0.0
    %908 = vmatprep.subr.mxu0 0.0
    %909 = vmatpush1.msra.mxu0 0.0
    %910 = vmatprep.subr.mxu0 0.0
    %911 = vmatpush1.msra.mxu0 0.0
    %912 = vmatprep.subr.mxu0 0.0
    %913 = vmatpush1.msra.mxu0 0.0
    %914 = vmatprep.subr.mxu0 0.0
    %915 = vmatpush1.msra.mxu0 0.0
    %916 = vmatprep.subr.mxu0 0.0
    %917 = vmatpush1.msra.mxu0 0.0
    %918 = vmatprep.subr.mxu0 0.0
    %919 = vmatpush1.msra.mxu0 0.0
    %920 = vmatprep.subr.mxu0 0.0
    %921 = vmatpush1.msra.mxu0 0.0
    %922 = vmatprep.subr.mxu0 0.0
    %923 = vmatpush1.msra.mxu0 0.0
    %924 = vmatprep.subr.mxu0 0.0
    %925 = vmatpush1.msra.mxu0 0.0
    %926 = vmatprep.subr.mxu0 0.0
    %927 = vmatpush1.msra.mxu0 0.0
    %928 = vmatprep.subr.mxu0 0.0
    %929 = vmatpush1.msra.mxu0 0.0
    %930 = vmatprep.subr.mxu0 0.0
    %931 = vmatpush1.msra.mxu0 0.0
    %932 = vmatprep.subr.mxu0 0.0
    %933 = vmatpush1.msra.mxu0 0.0
    %934 = vmatprep.subr.mxu0 0.0
    %935 = vmatpush1.msra.mxu0 0.0
    %936 = vmatprep.subr.mxu0 0.0
    %937 = vmatpush1.msra.mxu0 0.0
    %938 = vmatprep.subr.mxu0 0.0
    %939 = vmatpush1.msra.mxu0 0.0
    %940 = vmatprep.subr.mxu0 0.0
    %941 = vmatpush1.msra.mxu0 0.0
    %942 = vmatprep.subr.mxu0 0.0
    %943 = vmatpush1.msra.mxu0 0.0
    %944 = vmatprep.subr.mxu0 0.0
    %945 = vmatpush1.msra.mxu0 0.0
    %946 = vmatprep.subr.mxu0 0.0
    %947 = vmatpush1.msra.mxu0 0.0
    %948 = vmatprep.subr.mxu0 0.0
    %949 = vmatpush1.msra.mxu0 0.0
    %950 = vmatprep.mubr.f32.mxu0 0.0
    %v951 = vand.u32 %v688, 4294901760
    %v952 = vsub.f32 %v688, %v951
    %953 = vmatmul.mubr.f32.gmra.mrb[0].mxu0 %v952
    %v954 = vpop.f32.mrb[0].mxu0
    %v955 = vadd.f32 %v870, %v954
    %v956 = vpop.f32.mrb[0].mxu0
    %v957 = vadd.f32 %v872, %v956
    %958 = vdwg.mxu0
    %v959 = vand.u32 %v673, 4294901760
    %960 = vmatprep.subr.mxu0 %v959
    %v961 = vand.u32 %v672, 4294901760
    %962 = vmatpush1.msra.mxu0 %v961
    %v963 = vand.u32 %v665, 4294901760
    %964 = vmatprep.subr.mxu0 %v963
    %v965 = vand.u32 %v664, 4294901760
    %966 = vmatpush1.msra.mxu0 %v965
    %v967 = vand.u32 %v681, 4294901760
    %968 = vmatprep.subr.mxu0 %v967
    %v969 = vand.u32 %v680, 4294901760
    %970 = vmatpush1.msra.mxu0 %v969
    %971 = vmatprep.subr.mxu0 0.0
    %972 = vmatpush1.msra.mxu0 0.0
    %973 = vmatprep.subr.mxu0 0.0
    %974 = vmatpush1.msra.mxu0 0.0
    %975 = vmatprep.subr.mxu0 0.0
    %976 = vmatpush1.msra.mxu0 0.0
    %977 = vmatprep.subr.mxu0 0.0
    %978 = vmatpush1.msra.mxu0 0.0
    %979 = vmatprep.subr.mxu0 0.0
    %980 = vmatpush1.msra.mxu0 0.0
    %981 = vmatprep.subr.mxu0 0.0
    %982 = vmatpush1.msra.mxu0 0.0
    %983 = vmatprep.subr.mxu0 0.0
    %984 = vmatpush1.msra.mxu0 0.0
    %985 = vmatprep.subr.mxu0 0.0
    %986 = vmatpush1.msra.mxu0 0.0
    %987 = vmatprep.subr.mxu0 0.0
    %988 = vmatpush1.msra.mxu0 0.0
    %989 = vmatprep.subr.mxu0 0.0
    %990 = vmatpush1.msra.mxu0 0.0
    %991 = vmatprep.subr.mxu0 0.0
    %992 = vmatpush1.msra.mxu0 0.0
    %993 = vmatprep.subr.mxu0 0.0
    %994 = vmatpush1.msra.mxu0 0.0
    %995 = vmatprep.subr.mxu0 0.0
    %996 = vmatpush1.msra.mxu0 0.0
    %997 = vmatprep.subr.mxu0 0.0
    %998 = vmatpush1.msra.mxu0 0.0
    %999 = vmatprep.subr.mxu0 0.0
    %1000 = vmatpush1.msra.mxu0 0.0
    %1001 = vmatprep.subr.mxu0 0.0
    %1002 = vmatpush1.msra.mxu0 0.0
    %1003 = vmatprep.subr.mxu0 0.0
    %1004 = vmatpush1.msra.mxu0 0.0
    %1005 = vmatprep.subr.mxu0 0.0
    %1006 = vmatpush1.msra.mxu0 0.0
    %1007 = vmatprep.subr.mxu0 0.0
    %1008 = vmatpush1.msra.mxu0 0.0
    %1009 = vmatprep.subr.mxu0 0.0
    %1010 = vmatpush1.msra.mxu0 0.0
    %1011 = vmatprep.subr.mxu0 0.0
    %1012 = vmatpush1.msra.mxu0 0.0
    %1013 = vmatprep.subr.mxu0 0.0
    %1014 = vmatpush1.msra.mxu0 0.0
    %1015 = vmatprep.subr.mxu0 0.0
    %1016 = vmatpush1.msra.mxu0 0.0
    %1017 = vmatprep.subr.mxu0 0.0
    %1018 = vmatpush1.msra.mxu0 0.0
    %1019 = vmatprep.subr.mxu0 0.0
    %1020 = vmatpush1.msra.mxu0 0.0
    %1021 = vmatprep.subr.mxu0 0.0
    %1022 = vmatpush1.msra.mxu0 0.0
    %1023 = vmatprep.subr.mxu0 0.0
    %1024 = vmatpush1.msra.mxu0 0.0
    %1025 = vmatprep.subr.mxu0 0.0
    %1026 = vmatpush1.msra.mxu0 0.0
    %1027 = vmatprep.subr.mxu0 0.0
    %1028 = vmatpush1.msra.mxu0 0.0
    %1029 = vmatprep.mubr.f32.mxu0 0.0
    %v1030 = vand.u32 %v688, 4294901760
    %v1031 = vsub.f32 %v688, %v1030
    %v1032 = vand.u32 %v1031, 4294901760
    %1033 = vmatmul.mubr.f32.gmra.mrb[0].mxu0 %v1032
    %v1034 = vpop.f32.mrb[0].mxu0
    %v1035 = vadd.f32 %v955, %v1034
    %v1036 = vpop.f32.mrb[0].mxu0
    %v1037 = vadd.f32 %v957, %v1036
    %1038 = vdwg.mxu0
    %v1039 = vand.u32 %v673, 4294901760
    %v1040 = vsub.f32 %v673, %v1039
    %v1041 = vand.u32 %v1040, 4294901760
    %1042 = vmatprep.subr.mxu0 %v1041
    %v1043 = vand.u32 %v672, 4294901760
    %v1044 = vsub.f32 %v672, %v1043
    %v1045 = vand.u32 %v1044, 4294901760
    %1046 = vmatpush1.msra.mxu0 %v1045
    %v1047 = vand.u32 %v665, 4294901760
    %v1048 = vsub.f32 %v665, %v1047
    %v1049 = vand.u32 %v1048, 4294901760
    %1050 = vmatprep.subr.mxu0 %v1049
    %v1051 = vand.u32 %v664, 4294901760
    %v1052 = vsub.f32 %v664, %v1051
    %v1053 = vand.u32 %v1052, 4294901760
    %1054 = vmatpush1.msra.mxu0 %v1053
    %v1055 = vand.u32 %v681, 4294901760
    %v1056 = vsub.f32 %v681, %v1055
    %v1057 = vand.u32 %v1056, 4294901760
    %1058 = vmatprep.subr.mxu0 %v1057
    %v1059 = vand.u32 %v680, 4294901760
    %v1060 = vsub.f32 %v680, %v1059
    %v1061 = vand.u32 %v1060, 4294901760
    %1062 = vmatpush1.msra.mxu0 %v1061
    %1063 = vmatprep.subr.mxu0 0.0
    %1064 = vmatpush1.msra.mxu0 0.0
    %1065 = vmatprep.subr.mxu0 0.0
    %1066 = vmatpush1.msra.mxu0 0.0
    %1067 = vmatprep.subr.mxu0 0.0
    %1068 = vmatpush1.msra.mxu0 0.0
    %1069 = vmatprep.subr.mxu0 0.0
    %1070 = vmatpush1.msra.mxu0 0.0
    %1071 = vmatprep.subr.mxu0 0.0
    %1072 = vmatpush1.msra.mxu0 0.0
    %1073 = vmatprep.subr.mxu0 0.0
    %1074 = vmatpush1.msra.mxu0 0.0
    %1075 = vmatprep.subr.mxu0 0.0
    %1076 = vmatpush1.msra.mxu0 0.0
    %1077 = vmatprep.subr.mxu0 0.0
    %1078 = vmatpush1.msra.mxu0 0.0
    %1079 = vmatprep.subr.mxu0 0.0
    %1080 = vmatpush1.msra.mxu0 0.0
    %1081 = vmatprep.subr.mxu0 0.0
    %1082 = vmatpush1.msra.mxu0 0.0
    %1083 = vmatprep.subr.mxu0 0.0
    %1084 = vmatpush1.msra.mxu0 0.0
    %1085 = vmatprep.subr.mxu0 0.0
    %1086 = vmatpush1.msra.mxu0 0.0
    %1087 = vmatprep.subr.mxu0 0.0
    %1088 = vmatpush1.msra.mxu0 0.0
    %1089 = vmatprep.subr.mxu0 0.0
    %1090 = vmatpush1.msra.mxu0 0.0
    %1091 = vmatprep.subr.mxu0 0.0
    %1092 = vmatpush1.msra.mxu0 0.0
    %1093 = vmatprep.subr.mxu0 0.0
    %1094 = vmatpush1.msra.mxu0 0.0
    %1095 = vmatprep.subr.mxu0 0.0
    %1096 = vmatpush1.msra.mxu0 0.0
    %1097 = vmatprep.subr.mxu0 0.0
    %1098 = vmatpush1.msra.mxu0 0.0
    %1099 = vmatprep.subr.mxu0 0.0
    %1100 = vmatpush1.msra.mxu0 0.0
    %1101 = vmatprep.subr.mxu0 0.0
    %1102 = vmatpush1.msra.mxu0 0.0
    %1103 = vmatprep.subr.mxu0 0.0
    %1104 = vmatpush1.msra.mxu0 0.0
    %1105 = vmatprep.subr.mxu0 0.0
    %1106 = vmatpush1.msra.mxu0 0.0
    %1107 = vmatprep.subr.mxu0 0.0
    %1108 = vmatpush1.msra.mxu0 0.0
    %1109 = vmatprep.subr.mxu0 0.0
    %1110 = vmatpush1.msra.mxu0 0.0
    %1111 = vmatprep.subr.mxu0 0.0
    %1112 = vmatpush1.msra.mxu0 0.0
    %1113 = vmatprep.subr.mxu0 0.0
    %1114 = vmatpush1.msra.mxu0 0.0
    %1115 = vmatprep.subr.mxu0 0.0
    %1116 = vmatpush1.msra.mxu0 0.0
    %1117 = vmatprep.subr.mxu0 0.0
    %1118 = vmatpush1.msra.mxu0 0.0
    %1119 = vmatprep.subr.mxu0 0.0
    %1120 = vmatpush1.msra.mxu0 0.0
    %1121 = vmatprep.mubr.f32.mxu0 0.0
    %v1122 = vand.u32 %v688, 4294901760
    %1123 = vmatmul.mubr.f32.gmra.mrb[0].mxu0 %v1122
    %v1124 = vpop.f32.mrb[0].mxu0
    %v1125 = vadd.f32 %v1035, %v1124
    %v1126 = vpop.f32.mrb[0].mxu0
    %v1127 = vadd.f32 %v1037, %v1126
    %1128 = vdwg.mxu0
    %v1129 = vand.u32 %v673, 4294901760
    %1130 = vmatprep.subr.mxu0 %v1129
    %v1131 = vand.u32 %v672, 4294901760
    %1132 = vmatpush1.msra.mxu0 %v1131
    %v1133 = vand.u32 %v665, 4294901760
    %1134 = vmatprep.subr.mxu0 %v1133
    %v1135 = vand.u32 %v664, 4294901760
    %1136 = vmatpush1.msra.mxu0 %v1135
    %v1137 = vand.u32 %v681, 4294901760
    %1138 = vmatprep.subr.mxu0 %v1137
    %v1139 = vand.u32 %v680, 4294901760
    %1140 = vmatpush1.msra.mxu0 %v1139
    %1141 = vmatprep.subr.mxu0 0.0
    %1142 = vmatpush1.msra.mxu0 0.0
    %1143 = vmatprep.subr.mxu0 0.0
    %1144 = vmatpush1.msra.mxu0 0.0
    %1145 = vmatprep.subr.mxu0 0.0
    %1146 = vmatpush1.msra.mxu0 0.0
    %1147 = vmatprep.subr.mxu0 0.0
    %1148 = vmatpush1.msra.mxu0 0.0
    %1149 = vmatprep.subr.mxu0 0.0
    %1150 = vmatpush1.msra.mxu0 0.0
    %1151 = vmatprep.subr.mxu0 0.0
    %1152 = vmatpush1.msra.mxu0 0.0
    %1153 = vmatprep.subr.mxu0 0.0
    %1154 = vmatpush1.msra.mxu0 0.0
    %1155 = vmatprep.subr.mxu0 0.0
    %1156 = vmatpush1.msra.mxu0 0.0
    %1157 = vmatprep.subr.mxu0 0.0
    %1158 = vmatpush1.msra.mxu0 0.0
    %1159 = vmatprep.subr.mxu0 0.0
    %1160 = vmatpush1.msra.mxu0 0.0
    %1161 = vmatprep.subr.mxu0 0.0
    %1162 = vmatpush1.msra.mxu0 0.0
    %1163 = vmatprep.subr.mxu0 0.0
    %1164 = vmatpush1.msra.mxu0 0.0
    %1165 = vmatprep.subr.mxu0 0.0
    %1166 = vmatpush1.msra.mxu0 0.0
    %1167 = vmatprep.subr.mxu0 0.0
    %1168 = vmatpush1.msra.mxu0 0.0
    %1169 = vmatprep.subr.mxu0 0.0
    %1170 = vmatpush1.msra.mxu0 0.0
    %1171 = vmatprep.subr.mxu0 0.0
    %1172 = vmatpush1.msra.mxu0 0.0
    %1173 = vmatprep.subr.mxu0 0.0
    %1174 = vmatpush1.msra.mxu0 0.0
    %1175 = vmatprep.subr.mxu0 0.0
    %1176 = vmatpush1.msra.mxu0 0.0
    %1177 = vmatprep.subr.mxu0 0.0
    %1178 = vmatpush1.msra.mxu0 0.0
    %1179 = vmatprep.subr.mxu0 0.0
    %1180 = vmatpush1.msra.mxu0 0.0
    %1181 = vmatprep.subr.mxu0 0.0
    %1182 = vmatpush1.msra.mxu0 0.0
    %1183 = vmatprep.subr.mxu0 0.0
    %1184 = vmatpush1.msra.mxu0 0.0
    %1185 = vmatprep.subr.mxu0 0.0
    %1186 = vmatpush1.msra.mxu0 0.0
    %1187 = vmatprep.subr.mxu0 0.0
    %1188 = vmatpush1.msra.mxu0 0.0
    %1189 = vmatprep.subr.mxu0 0.0
    %1190 = vmatpush1.msra.mxu0 0.0
    %1191 = vmatprep.subr.mxu0 0.0
    %1192 = vmatpush1.msra.mxu0 0.0
    %1193 = vmatprep.subr.mxu0 0.0
    %1194 = vmatpush1.msra.mxu0 0.0
    %1195 = vmatprep.subr.mxu0 0.0
    %1196 = vmatpush1.msra.mxu0 0.0
    %1197 = vmatprep.subr.mxu0 0.0
    %1198 = vmatpush1.msra.mxu0 0.0
    %1199 = vmatprep.mubr.f32.mxu0 0.0
    %v1200 = vand.u32 %v688, 4294901760
    %1201 = vmatmul.mubr.f32.gmra.mrb[0].mxu0 %v1200
    %v1202 = vpop.f32.mrb[0].mxu0
    %v1203 = vadd.f32 %v1125, %v1202
    %v1204 = vpop.f32.mrb[0].mxu0
    %v1205 = vadd.f32 %v1127, %v1204
    %1206 = vdwg.mxu0
    %v1207 = vadd.f32 %v1203, %v1205
    %1208 = vadd.xlane.f32.xlu0 %v1207
    %v1209 = vpop.xlane.xlu0 %1208
    %v1210 = vmul.f32 %v1209, %v611
    %v1211 = vmul.f32 %v1203, %v1203
    %v1212 = vmul.f32 %v1205, %v1205
    %v1213 = vadd.f32 %v1211, %v1212
    %1214 = vadd.xlane.f32.xlu0 %v1213
    %v1215 = vpop.xlane.xlu0 %1214
    %v1216 = vmul.f32 %v1215, %v611
    %v1217 = vmul.f32 %v1210, %v1210
    %v1218 = vsub.f32 %v1216, %v1217
    %v1219 = vadd.f32 %v1218, 1e-05
    %v1220 = vrsqrt.pop %v1219
    %v1221 = vsub.f32 %v1203, %v1210
    %v1222 = vsub.f32 %v1205, %v1210
    %v1223 = vmul.f32 %v1221, %v1220
    %v1224 = vmul.f32 %v1222, %v1220
    %v1225 = vmul.f32 %v1218, %v1220
    %v1226 = vmul.f32 %v1225, %v1220
    %v1227 = vadd.f32 %v1226, 0.0
    %v1229 = vrot.slane %v1226, 4
    %v1231 = vadd.f32 %v1227, %v1229
    %v1232 = vmul.f32 %v1231, %v634
    %v1234 = vrot.slane %v1232, 4
    %v1236 = vsel %vm639, %v1232, %v1234
    %v1237 = vadd.f32 %v1236, 1e-05
    %v1238 = vrsqrt.pop %v1237
    %1240 = vset.pattern.permute.xlu0 0
    %1241 = vperm.xlu0 %1240, %v1238
    %v1242 = vpop.permute.xlu0 %1241
    %v1244 = vmul.f32 %v1223, %v1242
    %v1245 = vmul.f32 %v1224, %v1242
    %1247 = vset.pattern.permute.xlu0 0
    %1248 = vperm.xlu0 %1247, %v23
    %v1249 = vpop.permute.xlu0 %1248
    %v1251 = vmul.f32 %v1244, %v1249
    %v1252 = vmul.f32 %v1245, %v1249
    %1254 = vset.pattern.permute.xlu0 0
    %1255 = vperm.xlu0 %1254, %v24
    %v1256 = vpop.permute.xlu0 %1255
    %v1258 = vadd.f32 %v1251, %v1256
    %v1259 = vadd.f32 %v1252, %v1256
    %v1260 = vadd.f32 %v1258, %v15
    %v1261 = vadd.f32 %v1259, %v16
    %v1262 = vmax.f32 %v1260, 0.0
    %v1263 = vmax.f32 %v1261, 0.0
    %1264 = vst [vmem:[#allocation2] sm:$0xff] %v1262
    %1265 = vst [vmem:[#allocation2 + $0x8] sm:$0xff] %v1263
    // Predicated region
    $region14: #{tpu_custom_call.1} parent=1 // pred_check
      _
    $region15: #{tpu_custom_call.1} parent=1 // pred_check_branch
      %1267 = sbr.rel (0) target = $region17
    $region16: #{tpu_custom_call.1} parent=1 // pred_region
      %s1269 = ssub.s32 256, 256
      %1270 = vsyncadd [#allocation3], %s1269
      %s1272 = sshll.u32 [#allocation2], 4
      %s1273 = int_to_ptr.vmem [resolvable:$true] %s1272
      %1275 = dma.vmem_to_hbm [thread:$0]  %s1273, 256, %s3, [#allocation3]
    $region17: #{tpu_custom_call.1} parent=1 // pred_fallthru
      _
    // Predicated region
    $region18: #{tpu_custom_call.1} parent=1 // pred_check
      _
    $region19: #{tpu_custom_call.1} parent=1 // pred_check_branch
      %1277 = sbr.rel (0) target = $region21
    $region20: #{tpu_custom_call.1} parent=1 // pred_region
      %1278 = dma.done [#allocation3], 256
    $region21: #{tpu_custom_call.1} parent=1 // pred_fallthru
      _
    %1279 = vsyncpa [#allocation3], 1

</llo_original>
